<compile_context>
chip_gen: v5e
topology: v5e:2x2
jax: 0.10.0
libtpu: 0.0.40
codegen_flags: <defaults>
</compile_context>

<pallas_src>
import functools
import math

import jax
import jax.numpy as jnp
from jax.experimental import pallas as pl
from jax.experimental.pallas import tpu as pltpu


CFG = dict(
    vocab=100,
    hidden=32,
    heads=4,
    layers=2,
    intermediate=64,
    seq=8,
    batch=2,
    max_pos=32,
    num_labels=2,
    out_rows=8,     # sublane-padded classifier output rows
    out_lanes=128,  # lane-dense padded classifier output width
)


def _round_up(x, m):
    return (x + m - 1) // m * m


def _vec_row_layer(l):
    # per-layer rows in the f32 slab: bqkv, bo, ln1_g, ln1_b, b1, b2, ln2_g, ln2_b
    return 2 + 8 * l


def _mat_row_layer(l, hidden, intermediate):
    # per-layer rows in the bf16 slab: wqkv(H) | wo(H) | w1(H) | w2(I)
    return l * (3 * hidden + intermediate)


# ----------------------------------------------------------------------------
# One fused Pallas kernel: embedding LN -> L encoder layers -> pooler -> head
# ----------------------------------------------------------------------------
def _fused_forward_kernel(
    x_ref, mask_ref, vec_ref, mat_ref, out_ref, *,
    num_layers, num_heads, batch, seq, hidden, head_dim, intermediate,
    out_rows, out_lanes, eps,
):
    H, I, dh = hidden, intermediate, head_dim
    scale = 1.0 / math.sqrt(dh)
    f32, bf16 = jnp.float32, jnp.bfloat16

    def vrow(r, width):                         # (1, width) f32 bias / LN row
        return vec_ref[r:r + 1, 0:width]

    def mblk(r, nrows, width):                  # (nrows, width) bf16 weight block
        return mat_ref[r:r + nrows, 0:width]

    def mm(a, w):                               # bf16 MXU operands, f32 accumulate
        return jnp.dot(a.astype(bf16), w, preferred_element_type=f32)

    def layer_norm(v, g, b):
        mean = jnp.mean(v, axis=-1, keepdims=True)
        c = v - mean
        var = jnp.mean(c * c, axis=-1, keepdims=True)
        return c * jax.lax.rsqrt(var + eps) * g + b

    def gelu(v):
        # TODO(synk): HF XLM-R uses exact erf-GELU; tanh approximation (~1e-3 diff).
        return 0.5 * v * (1.0 + jnp.tanh(0.7978845608028654 * (v + 0.044715 * v * v * v)))

    add_mask = mask_ref[...]                    # (tokens, tokens) additive mask
    x = layer_norm(x_ref[...], vrow(0, H), vrow(1, H))          # (tokens, H) f32

    # Static unroll is fine at L=2; switch to a layer grid axis / emit_pipeline
    # (streamed per-layer weights) for real XLM-R depths.
    for l in range(num_layers):
        mbase = _mat_row_layer(l, H, I)
        vbase = _vec_row_layer(l)

        # Fused QKV projection: one (tokens,H)@(H,3H) MXU push per layer.
        y = mm(x, mblk(mbase, H, 3 * H)) + vrow(vbase + 0, 3 * H)    # (tokens, 3H)

        # Head-batched attention: one score einsum / softmax / ctx einsum per layer.
        q3 = jnp.stack([y[:, h * dh:(h + 1) * dh] for h in range(num_heads)], axis=0)
        k3 = jnp.stack([y[:, H + h * dh:H + (h + 1) * dh] for h in range(num_heads)], axis=0)
        v3 = jnp.stack([y[:, 2 * H + h * dh:2 * H + (h + 1) * dh] for h in range(num_heads)], axis=0)

        s = jnp.einsum("htd,hsd->hts", q3.astype(bf16), k3.astype(bf16),
                       preferred_element_type=f32) * scale           # (nH, T, T)
        s = s + add_mask[None, :, :]           # block-diag over batch + key padding
        s = s - jnp.max(s, axis=-1, keepdims=True)
        p = jnp.exp(s)
        p = p * pl.reciprocal(jnp.sum(p, axis=-1, keepdims=True), approx=True)
        ctx3 = jnp.einsum("hts,hsd->htd", p.astype(bf16), v3.astype(bf16),
                          preferred_element_type=f32)                # (nH, T, dh)
        ctx = jnp.concatenate([ctx3[h] for h in range(num_heads)], axis=-1)

        # Single output projection against the full (H,H) matrix.
        attn = mm(ctx, mblk(mbase + H, H, H)) + vrow(vbase + 1, H)
        x = layer_norm(attn + x, vrow(vbase + 2, H), vrow(vbase + 3, H))

        # Feed-forward.
        ff = gelu(mm(x, mblk(mbase + 2 * H, H, I)) + vrow(vbase + 4, I))
        ff = mm(ff, mblk(mbase + 3 * H, I, H)) + vrow(vbase + 5, H)
        x = layer_norm(ff + x, vrow(vbase + 6, H), vrow(vbase + 7, H))

    # Pooler on CLS rows (static row slices, no (B,S,H) reshape) + classifier.
    cls = jnp.concatenate([x[b * seq:b * seq + 1, :] for b in range(batch)], axis=0)
    mr_wp = _mat_row_layer(num_layers, H, I)
    vr_bp = _vec_row_layer(num_layers)
    pooled = jnp.tanh(mm(cls, mblk(mr_wp, H, H)) + vrow(vr_bp, H))   # (batch, H)
    if out_rows > batch:  # pad sublanes so the final store is a full (8,128) tile
        pooled = jnp.concatenate(
            [pooled, jnp.zeros((out_rows - batch, H), f32)], axis=0)
    logits = mm(pooled, mat_ref[mr_wp + H:mr_wp + 2 * H, :]) + vrow(vr_bp + 1, out_lanes)
    out_ref[...] = logits.astype(out_ref.dtype)


# ----------------------------------------------------------------------------
# Parameter init (deterministic random, packed into 2 slabs for the kernel)
# ----------------------------------------------------------------------------
def init_params(key, cfg):
    std = 0.02
    H, I, L = cfg["hidden"], cfg["intermediate"], cfg["layers"]
    NL = cfg["num_labels"]
    lanes = 128

    keys = iter(jax.random.split(key, 64))

    def w(shape):
        return std * jax.random.normal(next(keys), shape, jnp.float32)

    word_emb = w((cfg["vocab"], H))
    pos_emb = w((cfg["max_pos"], H))
    type_emb = w((1, H))

    # ---- packed matmul-weight slab: (rows, 128) bf16 -------------------------
    mat_rows = _round_up(L * (3 * H + I) + 2 * H, 16)
    mat = jnp.zeros((mat_rows, lanes), jnp.float32)
    for l in range(L):
        base = _mat_row_layer(l, H, I)
        wqkv = jnp.concatenate([w((H, H)), w((H, H)), w((H, H))], axis=1)   # Q|K|V
        mat = mat.at[base:base + H, 0:3 * H].set(wqkv)
        mat = mat.at[base + H:base + 2 * H, 0:H].set(w((H, H)))             # Wo
        mat = mat.at[base + 2 * H:base + 3 * H, 0:I].set(w((H, I)))         # W1
        mat = mat.at[base + 3 * H:base + 3 * H + I, 0:H].set(w((I, H)))     # W2
    mr_wp = _mat_row_layer(L, H, I)
    mat = mat.at[mr_wp:mr_wp + H, 0:H].set(w((H, H)))                       # pooler
    mat = mat.at[mr_wp + H:mr_wp + 2 * H, 0:NL].set(w((H, NL)))             # classifier
    mat_slab = mat.astype(jnp.bfloat16)

    # ---- packed LayerNorm/bias slab: (rows, 128) f32 -------------------------
    # Rows: emb_ln_g, emb_ln_b, per-layer [bqkv, bo, ln1_g, ln1_b, b1, b2,
    # ln2_g, ln2_b], then bp, bout.  All biases / betas are zero for this toy.
    # TODO(synk): a real checkpoint load must fill the QKV/out/FFN/pooler bias rows.
    vec_rows = _round_up(_vec_row_layer(L) + 2, 8)
    vec = jnp.zeros((vec_rows, lanes), jnp.float32)
    vec = vec.at[0, 0:H].set(1.0)                       # embedding LN gamma
    for l in range(L):
        vb = _vec_row_layer(l)
        vec = vec.at[vb + 2, 0:H].set(1.0)              # ln1 gamma
        vec = vec.at[vb + 6, 0:H].set(1.0)              # ln2 gamma
    vec_slab = vec

    return dict(word_emb=word_emb, pos_emb=pos_emb, type_emb=type_emb,
                mat_slab=mat_slab, vec_slab=vec_slab)


# ----------------------------------------------------------------------------
# Forward: mirrors xlmr_Classifier.forward (bert_output accepted but unused)
# ----------------------------------------------------------------------------
def xlmr_classifier_forward(params, input_ids, attention_mask, bert_output=None):
    del bert_output
    cfg = CFG
    B, S = input_ids.shape
    H, nH, L, I = cfg["hidden"], cfg["heads"], cfg["layers"], cfg["intermediate"]
    dh = H // nH
    tokens = B * S

    # ---- embeddings (gathers are plain-JAX glue) ----
    mask_i = attention_mask.astype(jnp.int32)
    # XLM-R create_position_ids_from_input_ids: pads keep padding position 1.
    position_ids = jnp.cumsum(mask_i, axis=1) * mask_i + 1
    emb = (params["word_emb"][input_ids]
           + params["pos_emb"][position_ids]
           + params["type_emb"][0][None, None, :])
    x = emb.reshape(tokens, H).astype(jnp.float32)

    # Additive (tokens, tokens) mask: block-diagonal over batch + key padding.
    valid = attention_mask.astype(jnp.float32).reshape(tokens)
    bid = jnp.repeat(jnp.arange(B), S)
    allow = (bid[:, None] == bid[None, :]).astype(jnp.float32) * valid[None, :]
    add_mask = (1.0 - allow) * -1e9

    kernel = functools.partial(
        _fused_forward_kernel,
        num_layers=L, num_heads=nH, batch=B, seq=S, hidden=H, head_dim=dh,
        intermediate=I, out_rows=cfg["out_rows"], out_lanes=cfg["out_lanes"],
        eps=1e-5)

    out = pl.pallas_call(
        kernel,
        out_shape=jax.ShapeDtypeStruct((cfg["out_rows"], cfg["out_lanes"]),
                                       jnp.float32),
        in_specs=[pl.BlockSpec(memory_space=pltpu.MemorySpace.VMEM)] * 4,
        out_specs=pl.BlockSpec(memory_space=pltpu.MemorySpace.VMEM),
    )(x, add_mask, params["vec_slab"], params["mat_slab"])

    return out[:B, :cfg["num_labels"]]


# ----------------------------------------------------------------------------
if __name__ == "__main__":
    key = jax.random.PRNGKey(0)
    k_param, k_ids = jax.random.split(key)

    params = init_params(k_param, CFG)

    B, S = CFG["batch"], CFG["seq"]
    input_ids = jax.random.randint(k_ids, (B, S), 0, CFG["vocab"], dtype=jnp.int32)
    attention_mask = jnp.ones((B, S), dtype=jnp.int32).at[1, -2:].set(0)  # pad last 2 of row 1
    bert_output = jnp.zeros((B, S, CFG["hidden"]), jnp.float32)           # unused, like reference

    logits = xlmr_classifier_forward(params, input_ids, attention_mask, bert_output)
    logits = jax.block_until_ready(logits)

    assert logits.shape == (B, CFG["num_labels"])
    assert bool(jnp.all(jnp.isfinite(logits)))
    print("KERNEL_OK")
</pallas_src>

<mosaic_0001>
module attributes {stable_mosaic.version = 11 : i64} {
  func.func @_fused_forward_kernel(%arg0: memref<16x32xf32, #tpu.memory_space<vmem>>, %arg1: memref<16x16xf32, #tpu.memory_space<vmem>>, %arg2: memref<24x128xf32, #tpu.memory_space<vmem>>, %arg3: memref<384x128xbf16, #tpu.memory_space<vmem>>, %arg4: memref<8x128xf32, #tpu.memory_space<vmem>>) attributes {dimension_semantics = [], scalar_prefetch = 0 : i64, scratch_operands = 0 : i64, tpu.core_type = #tpu.core_type<tc>} {
    %c0 = arith.constant 0 : index
    %c0_0 = arith.constant 0 : index
    %0 = vector.load %arg1[%c0, %c0_0] : memref<16x16xf32, #tpu.memory_space<vmem>>, vector<16x16xf32>
    %c0_1 = arith.constant 0 : index
    %c0_2 = arith.constant 0 : index
    %1 = vector.load %arg0[%c0_1, %c0_2] : memref<16x32xf32, #tpu.memory_space<vmem>>, vector<16x32xf32>
    %c0_3 = arith.constant 0 : index
    %c0_4 = arith.constant 0 : index
    %2 = vector.load %arg2[%c0_3, %c0_4] : memref<24x128xf32, #tpu.memory_space<vmem>>, vector<1x32xf32>
    %c1 = arith.constant 1 : index
    %c0_5 = arith.constant 0 : index
    %3 = vector.load %arg2[%c1, %c0_5] : memref<24x128xf32, #tpu.memory_space<vmem>>, vector<1x32xf32>
    %cst = arith.constant dense<0.000000e+00> : vector<16xf32>
    %4 = vector.multi_reduction <add>, %1, %cst [1] : vector<16x32xf32> to vector<16xf32>
    %5 = vector.shape_cast %4 : vector<16xf32> to vector<16x1xf32>
    %cst_6 = arith.constant 3.200000e+01 : f32
    %6 = vector.broadcast %cst_6 : f32 to vector<16x1xf32>
    %7 = arith.divf %5, %6 : vector<16x1xf32>
    %8 = vector.broadcast %7 : vector<16x1xf32> to vector<16x32xf32>
    %9 = arith.subf %1, %8 : vector<16x32xf32>
    %10 = arith.mulf %9, %9 : vector<16x32xf32>
    %cst_7 = arith.constant dense<0.000000e+00> : vector<16xf32>
    %11 = vector.multi_reduction <add>, %10, %cst_7 [1] : vector<16x32xf32> to vector<16xf32>
    %12 = vector.shape_cast %11 : vector<16xf32> to vector<16x1xf32>
    %cst_8 = arith.constant 3.200000e+01 : f32
    %13 = vector.broadcast %cst_8 : f32 to vector<16x1xf32>
    %14 = arith.divf %12, %13 : vector<16x1xf32>
    %cst_9 = arith.constant 9.99999974E-6 : f32
    %15 = vector.broadcast %cst_9 : f32 to vector<16x1xf32>
    %16 = arith.addf %14, %15 : vector<16x1xf32>
    %17 = math.rsqrt %16 : vector<16x1xf32>
    %18 = vector.broadcast %17 : vector<16x1xf32> to vector<16x32xf32>
    %19 = arith.mulf %9, %18 : vector<16x32xf32>
    %20 = vector.broadcast %2 : vector<1x32xf32> to vector<16x32xf32>
    %21 = arith.mulf %19, %20 : vector<16x32xf32>
    %22 = vector.broadcast %3 : vector<1x32xf32> to vector<16x32xf32>
    %23 = arith.addf %21, %22 : vector<16x32xf32>
    %c0_10 = arith.constant 0 : index
    %c0_11 = arith.constant 0 : index
    %24 = vector.load %arg3[%c0_10, %c0_11] : memref<384x128xbf16, #tpu.memory_space<vmem>>, vector<32x96xbf16>
    %25 = arith.truncf %23 : vector<16x32xf32> to vector<16x32xbf16>
    %cst_12 = arith.constant dense<0.000000e+00> : vector<16x96xf32>
    %26 = tpu.matmul %25, %24, %cst_12 {dimension_numbers = #tpu.dot_dimension_numbers<[1], [0], [0], [1], [0, 0, 1, 1], [], []>} : vector<16x32xbf16>, vector<32x96xbf16>, vector<16x96xf32> -> vector<16x96xf32>
    %c2 = arith.constant 2 : index
    %c0_13 = arith.constant 0 : index
    %27 = vector.load %arg2[%c2, %c0_13] : memref<24x128xf32, #tpu.memory_space<vmem>>, vector<1x96xf32>
    %28 = vector.broadcast %27 : vector<1x96xf32> to vector<16x96xf32>
    %29 = arith.addf %26, %28 : vector<16x96xf32>
    %30 = vector.extract_strided_slice %29 {offsets = [0, 0], sizes = [16, 8], strides = [1, 1]} : vector<16x96xf32> to vector<16x8xf32>
    %31 = vector.extract_strided_slice %29 {offsets = [0, 8], sizes = [16, 8], strides = [1, 1]} : vector<16x96xf32> to vector<16x8xf32>
    %32 = vector.extract_strided_slice %29 {offsets = [0, 16], sizes = [16, 8], strides = [1, 1]} : vector<16x96xf32> to vector<16x8xf32>
    %33 = vector.extract_strided_slice %29 {offsets = [0, 24], sizes = [16, 8], strides = [1, 1]} : vector<16x96xf32> to vector<16x8xf32>
    %34 = vector.shape_cast %30 : vector<16x8xf32> to vector<1x16x8xf32>
    %35 = vector.shape_cast %31 : vector<16x8xf32> to vector<1x16x8xf32>
    %36 = vector.shape_cast %32 : vector<16x8xf32> to vector<1x16x8xf32>
    %37 = vector.shape_cast %33 : vector<16x8xf32> to vector<1x16x8xf32>
    %38 = tpu.concatenate %34, %35, %36, %37 in 0 : vector<1x16x8xf32>, vector<1x16x8xf32>, vector<1x16x8xf32>, vector<1x16x8xf32> -> vector<4x16x8xf32>
    %39 = vector.extract_strided_slice %29 {offsets = [0, 32], sizes = [16, 8], strides = [1, 1]} : vector<16x96xf32> to vector<16x8xf32>
    %40 = vector.extract_strided_slice %29 {offsets = [0, 40], sizes = [16, 8], strides = [1, 1]} : vector<16x96xf32> to vector<16x8xf32>
    %41 = vector.extract_strided_slice %29 {offsets = [0, 48], sizes = [16, 8], strides = [1, 1]} : vector<16x96xf32> to vector<16x8xf32>
    %42 = vector.extract_strided_slice %29 {offsets = [0, 56], sizes = [16, 8], strides = [1, 1]} : vector<16x96xf32> to vector<16x8xf32>
    %43 = vector.shape_cast %39 : vector<16x8xf32> to vector<1x16x8xf32>
    %44 = vector.shape_cast %40 : vector<16x8xf32> to vector<1x16x8xf32>
    %45 = vector.shape_cast %41 : vector<16x8xf32> to vector<1x16x8xf32>
    %46 = vector.shape_cast %42 : vector<16x8xf32> to vector<1x16x8xf32>
    %47 = tpu.concatenate %43, %44, %45, %46 in 0 : vector<1x16x8xf32>, vector<1x16x8xf32>, vector<1x16x8xf32>, vector<1x16x8xf32> -> vector<4x16x8xf32>
    %48 = vector.extract_strided_slice %29 {offsets = [0, 64], sizes = [16, 8], strides = [1, 1]} : vector<16x96xf32> to vector<16x8xf32>
    %49 = vector.extract_strided_slice %29 {offsets = [0, 72], sizes = [16, 8], strides = [1, 1]} : vector<16x96xf32> to vector<16x8xf32>
    %50 = vector.extract_strided_slice %29 {offsets = [0, 80], sizes = [16, 8], strides = [1, 1]} : vector<16x96xf32> to vector<16x8xf32>
    %51 = vector.extract_strided_slice %29 {offsets = [0, 88], sizes = [16, 8], strides = [1, 1]} : vector<16x96xf32> to vector<16x8xf32>
    %52 = vector.shape_cast %48 : vector<16x8xf32> to vector<1x16x8xf32>
    %53 = vector.shape_cast %49 : vector<16x8xf32> to vector<1x16x8xf32>
    %54 = vector.shape_cast %50 : vector<16x8xf32> to vector<1x16x8xf32>
    %55 = vector.shape_cast %51 : vector<16x8xf32> to vector<1x16x8xf32>
    %56 = tpu.concatenate %52, %53, %54, %55 in 0 : vector<1x16x8xf32>, vector<1x16x8xf32>, vector<1x16x8xf32>, vector<1x16x8xf32> -> vector<4x16x8xf32>
    %57 = arith.truncf %38 : vector<4x16x8xf32> to vector<4x16x8xbf16>
    %58 = arith.truncf %47 : vector<4x16x8xf32> to vector<4x16x8xbf16>
    "tpu.trace_start"() <{level = 10 : i32, message = "htd,hsd->hts"}> : () -> ()
    %cst_14 = arith.constant dense<0.000000e+00> : vector<4x16x16xf32>
    %59 = tpu.matmul %57, %58, %cst_14 {dimension_numbers = #tpu.dot_dimension_numbers<[2], [2], [1], [1], [0, 0, 0, 1, 1, 1], [0], [0]>} : vector<4x16x8xbf16>, vector<4x16x8xbf16>, vector<4x16x16xf32> -> vector<4x16x16xf32>
    "tpu.trace_stop"() : () -> ()
    %cst_15 = arith.constant 0.353553385 : f32
    %60 = vector.broadcast %cst_15 : f32 to vector<4x16x16xf32>
    %61 = arith.mulf %59, %60 : vector<4x16x16xf32>
    %62 = vector.shape_cast %0 : vector<16x16xf32> to vector<1x16x16xf32>
    %63 = vector.broadcast %62 : vector<1x16x16xf32> to vector<4x16x16xf32>
    %64 = arith.addf %61, %63 : vector<4x16x16xf32>
    %cst_16 = arith.constant dense<0xFF800000> : vector<4x16xf32>
    %65 = vector.multi_reduction <maximumf>, %64, %cst_16 [2] : vector<4x16x16xf32> to vector<4x16xf32>
    %66 = vector.shape_cast %65 : vector<4x16xf32> to vector<4x16x1xf32>
    %67 = vector.broadcast %66 : vector<4x16x1xf32> to vector<4x16x16xf32>
    %68 = arith.subf %64, %67 : vector<4x16x16xf32>
    %69 = math.exp %68 : vector<4x16x16xf32>
    %cst_17 = arith.constant dense<0.000000e+00> : vector<4x16xf32>
    %70 = vector.multi_reduction <add>, %69, %cst_17 [2] : vector<4x16x16xf32> to vector<4x16xf32>
    %71 = vector.shape_cast %70 : vector<4x16xf32> to vector<4x16x1xf32>
    %72 = tpu.reciprocal %71 {approx = true} : vector<4x16x1xf32> -> vector<4x16x1xf32>
    %73 = vector.broadcast %72 : vector<4x16x1xf32> to vector<4x16x16xf32>
    %74 = arith.mulf %69, %73 : vector<4x16x16xf32>
    %75 = arith.truncf %74 : vector<4x16x16xf32> to vector<4x16x16xbf16>
    %76 = arith.truncf %56 : vector<4x16x8xf32> to vector<4x16x8xbf16>
    "tpu.trace_start"() <{level = 10 : i32, message = "hts,hsd->htd"}> : () -> ()
    %cst_18 = arith.constant dense<0.000000e+00> : vector<4x16x8xf32>
    %77 = tpu.matmul %75, %76, %cst_18 {dimension_numbers = #tpu.dot_dimension_numbers<[2], [1], [1], [2], [0, 0, 0, 1, 1, 2], [0], [0]>} : vector<4x16x16xbf16>, vector<4x16x8xbf16>, vector<4x16x8xf32> -> vector<4x16x8xf32>
    "tpu.trace_stop"() : () -> ()
    %78 = vector.extract_strided_slice %77 {offsets = [0, 0, 0], sizes = [1, 16, 8], strides = [1, 1, 1]} : vector<4x16x8xf32> to vector<1x16x8xf32>
    %79 = vector.shape_cast %78 : vector<1x16x8xf32> to vector<16x8xf32>
    %80 = vector.extract_strided_slice %77 {offsets = [1, 0, 0], sizes = [1, 16, 8], strides = [1, 1, 1]} : vector<4x16x8xf32> to vector<1x16x8xf32>
    %81 = vector.shape_cast %80 : vector<1x16x8xf32> to vector<16x8xf32>
    %82 = vector.extract_strided_slice %77 {offsets = [2, 0, 0], sizes = [1, 16, 8], strides = [1, 1, 1]} : vector<4x16x8xf32> to vector<1x16x8xf32>
    %83 = vector.shape_cast %82 : vector<1x16x8xf32> to vector<16x8xf32>
    %84 = vector.extract_strided_slice %77 {offsets = [3, 0, 0], sizes = [1, 16, 8], strides = [1, 1, 1]} : vector<4x16x8xf32> to vector<1x16x8xf32>
    %85 = vector.shape_cast %84 : vector<1x16x8xf32> to vector<16x8xf32>
    %86 = tpu.concatenate %79, %81, %83, %85 in 1 : vector<16x8xf32>, vector<16x8xf32>, vector<16x8xf32>, vector<16x8xf32> -> vector<16x32xf32>
    %c32 = arith.constant 32 : index
    %c0_19 = arith.constant 0 : index
    %87 = vector.load %arg3[%c32, %c0_19] : memref<384x128xbf16, #tpu.memory_space<vmem>>, vector<32x32xbf16>
    %88 = arith.truncf %86 : vector<16x32xf32> to vector<16x32xbf16>
    %cst_20 = arith.constant dense<0.000000e+00> : vector<16x32xf32>
    %89 = tpu.matmul %88, %87, %cst_20 {dimension_numbers = #tpu.dot_dimension_numbers<[1], [0], [0], [1], [0, 0, 1, 1], [], []>} : vector<16x32xbf16>, vector<32x32xbf16>, vector<16x32xf32> -> vector<16x32xf32>
    %c3 = arith.constant 3 : index
    %c0_21 = arith.constant 0 : index
    %90 = vector.load %arg2[%c3, %c0_21] : memref<24x128xf32, #tpu.memory_space<vmem>>, vector<1x32xf32>
    %91 = vector.broadcast %90 : vector<1x32xf32> to vector<16x32xf32>
    %92 = arith.addf %89, %91 : vector<16x32xf32>
    %93 = arith.addf %92, %23 : vector<16x32xf32>
    %c4 = arith.constant 4 : index
    %c0_22 = arith.constant 0 : index
    %94 = vector.load %arg2[%c4, %c0_22] : memref<24x128xf32, #tpu.memory_space<vmem>>, vector<1x32xf32>
    %c5 = arith.constant 5 : index
    %c0_23 = arith.constant 0 : index
    %95 = vector.load %arg2[%c5, %c0_23] : memref<24x128xf32, #tpu.memory_space<vmem>>, vector<1x32xf32>
    %cst_24 = arith.constant dense<0.000000e+00> : vector<16xf32>
    %96 = vector.multi_reduction <add>, %93, %cst_24 [1] : vector<16x32xf32> to vector<16xf32>
    %97 = vector.shape_cast %96 : vector<16xf32> to vector<16x1xf32>
    %cst_25 = arith.constant 3.200000e+01 : f32
    %98 = vector.broadcast %cst_25 : f32 to vector<16x1xf32>
    %99 = arith.divf %97, %98 : vector<16x1xf32>
    %100 = vector.broadcast %99 : vector<16x1xf32> to vector<16x32xf32>
    %101 = arith.subf %93, %100 : vector<16x32xf32>
    %102 = arith.mulf %101, %101 : vector<16x32xf32>
    %cst_26 = arith.constant dense<0.000000e+00> : vector<16xf32>
    %103 = vector.multi_reduction <add>, %102, %cst_26 [1] : vector<16x32xf32> to vector<16xf32>
    %104 = vector.shape_cast %103 : vector<16xf32> to vector<16x1xf32>
    %cst_27 = arith.constant 3.200000e+01 : f32
    %105 = vector.broadcast %cst_27 : f32 to vector<16x1xf32>
    %106 = arith.divf %104, %105 : vector<16x1xf32>
    %cst_28 = arith.constant 9.99999974E-6 : f32
    %107 = vector.broadcast %cst_28 : f32 to vector<16x1xf32>
    %108 = arith.addf %106, %107 : vector<16x1xf32>
    %109 = math.rsqrt %108 : vector<16x1xf32>
    %110 = vector.broadcast %109 : vector<16x1xf32> to vector<16x32xf32>
    %111 = arith.mulf %101, %110 : vector<16x32xf32>
    %112 = vector.broadcast %94 : vector<1x32xf32> to vector<16x32xf32>
    %113 = arith.mulf %111, %112 : vector<16x32xf32>
    %114 = vector.broadcast %95 : vector<1x32xf32> to vector<16x32xf32>
    %115 = arith.addf %113, %114 : vector<16x32xf32>
    %c64 = arith.constant 64 : index
    %c0_29 = arith.constant 0 : index
    %116 = vector.load %arg3[%c64, %c0_29] : memref<384x128xbf16, #tpu.memory_space<vmem>>, vector<32x64xbf16>
    %117 = arith.truncf %115 : vector<16x32xf32> to vector<16x32xbf16>
    %cst_30 = arith.constant dense<0.000000e+00> : vector<16x64xf32>
    %118 = tpu.matmul %117, %116, %cst_30 {dimension_numbers = #tpu.dot_dimension_numbers<[1], [0], [0], [1], [0, 0, 1, 1], [], []>} : vector<16x32xbf16>, vector<32x64xbf16>, vector<16x64xf32> -> vector<16x64xf32>
    %c6 = arith.constant 6 : index
    %c0_31 = arith.constant 0 : index
    %119 = vector.load %arg2[%c6, %c0_31] : memref<24x128xf32, #tpu.memory_space<vmem>>, vector<1x64xf32>
    %120 = vector.broadcast %119 : vector<1x64xf32> to vector<16x64xf32>
    %121 = arith.addf %118, %120 : vector<16x64xf32>
    %cst_32 = arith.constant 5.000000e-01 : f32
    %122 = vector.broadcast %cst_32 : f32 to vector<16x64xf32>
    %123 = arith.mulf %122, %121 : vector<16x64xf32>
    %cst_33 = arith.constant 4.471500e-02 : f32
    %124 = vector.broadcast %cst_33 : f32 to vector<16x64xf32>
    %125 = arith.mulf %124, %121 : vector<16x64xf32>
    %126 = arith.mulf %125, %121 : vector<16x64xf32>
    %127 = arith.mulf %126, %121 : vector<16x64xf32>
    %128 = arith.addf %121, %127 : vector<16x64xf32>
    %cst_34 = arith.constant 0.797884583 : f32
    %129 = vector.broadcast %cst_34 : f32 to vector<16x64xf32>
    %130 = arith.mulf %129, %128 : vector<16x64xf32>
    %131 = math.tanh %130 : vector<16x64xf32>
    %cst_35 = arith.constant 1.000000e+00 : f32
    %132 = vector.broadcast %cst_35 : f32 to vector<16x64xf32>
    %133 = arith.addf %132, %131 : vector<16x64xf32>
    %134 = arith.mulf %123, %133 : vector<16x64xf32>
    %c96 = arith.constant 96 : index
    %c0_36 = arith.constant 0 : index
    %135 = vector.load %arg3[%c96, %c0_36] : memref<384x128xbf16, #tpu.memory_space<vmem>>, vector<64x32xbf16>
    %136 = arith.truncf %134 : vector<16x64xf32> to vector<16x64xbf16>
    %cst_37 = arith.constant dense<0.000000e+00> : vector<16x32xf32>
    %137 = tpu.matmul %136, %135, %cst_37 {dimension_numbers = #tpu.dot_dimension_numbers<[1], [0], [0], [1], [0, 0, 1, 1], [], []>} : vector<16x64xbf16>, vector<64x32xbf16>, vector<16x32xf32> -> vector<16x32xf32>
    %c7 = arith.constant 7 : index
    %c0_38 = arith.constant 0 : index
    %138 = vector.load %arg2[%c7, %c0_38] : memref<24x128xf32, #tpu.memory_space<vmem>>, vector<1x32xf32>
    %139 = vector.broadcast %138 : vector<1x32xf32> to vector<16x32xf32>
    %140 = arith.addf %137, %139 : vector<16x32xf32>
    %141 = arith.addf %140, %115 : vector<16x32xf32>
    %c8 = arith.constant 8 : index
    %c0_39 = arith.constant 0 : index
    %142 = vector.load %arg2[%c8, %c0_39] : memref<24x128xf32, #tpu.memory_space<vmem>>, vector<1x32xf32>
    %c9 = arith.constant 9 : index
    %c0_40 = arith.constant 0 : index
    %143 = vector.load %arg2[%c9, %c0_40] : memref<24x128xf32, #tpu.memory_space<vmem>>, vector<1x32xf32>
    %cst_41 = arith.constant dense<0.000000e+00> : vector<16xf32>
    %144 = vector.multi_reduction <add>, %141, %cst_41 [1] : vector<16x32xf32> to vector<16xf32>
    %145 = vector.shape_cast %144 : vector<16xf32> to vector<16x1xf32>
    %cst_42 = arith.constant 3.200000e+01 : f32
    %146 = vector.broadcast %cst_42 : f32 to vector<16x1xf32>
    %147 = arith.divf %145, %146 : vector<16x1xf32>
    %148 = vector.broadcast %147 : vector<16x1xf32> to vector<16x32xf32>
    %149 = arith.subf %141, %148 : vector<16x32xf32>
    %150 = arith.mulf %149, %149 : vector<16x32xf32>
    %cst_43 = arith.constant dense<0.000000e+00> : vector<16xf32>
    %151 = vector.multi_reduction <add>, %150, %cst_43 [1] : vector<16x32xf32> to vector<16xf32>
    %152 = vector.shape_cast %151 : vector<16xf32> to vector<16x1xf32>
    %cst_44 = arith.constant 3.200000e+01 : f32
    %153 = vector.broadcast %cst_44 : f32 to vector<16x1xf32>
    %154 = arith.divf %152, %153 : vector<16x1xf32>
    %cst_45 = arith.constant 9.99999974E-6 : f32
    %155 = vector.broadcast %cst_45 : f32 to vector<16x1xf32>
    %156 = arith.addf %154, %155 : vector<16x1xf32>
    %157 = math.rsqrt %156 : vector<16x1xf32>
    %158 = vector.broadcast %157 : vector<16x1xf32> to vector<16x32xf32>
    %159 = arith.mulf %149, %158 : vector<16x32xf32>
    %160 = vector.broadcast %142 : vector<1x32xf32> to vector<16x32xf32>
    %161 = arith.mulf %159, %160 : vector<16x32xf32>
    %162 = vector.broadcast %143 : vector<1x32xf32> to vector<16x32xf32>
    %163 = arith.addf %161, %162 : vector<16x32xf32>
    %c160 = arith.constant 160 : index
    %c0_46 = arith.constant 0 : index
    %164 = vector.load %arg3[%c160, %c0_46] : memref<384x128xbf16, #tpu.memory_space<vmem>>, vector<32x96xbf16>
    %165 = arith.truncf %163 : vector<16x32xf32> to vector<16x32xbf16>
    %cst_47 = arith.constant dense<0.000000e+00> : vector<16x96xf32>
    %166 = tpu.matmul %165, %164, %cst_47 {dimension_numbers = #tpu.dot_dimension_numbers<[1], [0], [0], [1], [0, 0, 1, 1], [], []>} : vector<16x32xbf16>, vector<32x96xbf16>, vector<16x96xf32> -> vector<16x96xf32>
    %c10 = arith.constant 10 : index
    %c0_48 = arith.constant 0 : index
    %167 = vector.load %arg2[%c10, %c0_48] : memref<24x128xf32, #tpu.memory_space<vmem>>, vector<1x96xf32>
    %168 = vector.broadcast %167 : vector<1x96xf32> to vector<16x96xf32>
    %169 = arith.addf %166, %168 : vector<16x96xf32>
    %170 = vector.extract_strided_slice %169 {offsets = [0, 0], sizes = [16, 8], strides = [1, 1]} : vector<16x96xf32> to vector<16x8xf32>
    %171 = vector.extract_strided_slice %169 {offsets = [0, 8], sizes = [16, 8], strides = [1, 1]} : vector<16x96xf32> to vector<16x8xf32>
    %172 = vector.extract_strided_slice %169 {offsets = [0, 16], sizes = [16, 8], strides = [1, 1]} : vector<16x96xf32> to vector<16x8xf32>
    %173 = vector.extract_strided_slice %169 {offsets = [0, 24], sizes = [16, 8], strides = [1, 1]} : vector<16x96xf32> to vector<16x8xf32>
    %174 = vector.shape_cast %170 : vector<16x8xf32> to vector<1x16x8xf32>
    %175 = vector.shape_cast %171 : vector<16x8xf32> to vector<1x16x8xf32>
    %176 = vector.shape_cast %172 : vector<16x8xf32> to vector<1x16x8xf32>
    %177 = vector.shape_cast %173 : vector<16x8xf32> to vector<1x16x8xf32>
    %178 = tpu.concatenate %174, %175, %176, %177 in 0 : vector<1x16x8xf32>, vector<1x16x8xf32>, vector<1x16x8xf32>, vector<1x16x8xf32> -> vector<4x16x8xf32>
    %179 = vector.extract_strided_slice %169 {offsets = [0, 32], sizes = [16, 8], strides = [1, 1]} : vector<16x96xf32> to vector<16x8xf32>
    %180 = vector.extract_strided_slice %169 {offsets = [0, 40], sizes = [16, 8], strides = [1, 1]} : vector<16x96xf32> to vector<16x8xf32>
    %181 = vector.extract_strided_slice %169 {offsets = [0, 48], sizes = [16, 8], strides = [1, 1]} : vector<16x96xf32> to vector<16x8xf32>
    %182 = vector.extract_strided_slice %169 {offsets = [0, 56], sizes = [16, 8], strides = [1, 1]} : vector<16x96xf32> to vector<16x8xf32>
    %183 = vector.shape_cast %179 : vector<16x8xf32> to vector<1x16x8xf32>
    %184 = vector.shape_cast %180 : vector<16x8xf32> to vector<1x16x8xf32>
    %185 = vector.shape_cast %181 : vector<16x8xf32> to vector<1x16x8xf32>
    %186 = vector.shape_cast %182 : vector<16x8xf32> to vector<1x16x8xf32>
    %187 = tpu.concatenate %183, %184, %185, %186 in 0 : vector<1x16x8xf32>, vector<1x16x8xf32>, vector<1x16x8xf32>, vector<1x16x8xf32> -> vector<4x16x8xf32>
    %188 = vector.extract_strided_slice %169 {offsets = [0, 64], sizes = [16, 8], strides = [1, 1]} : vector<16x96xf32> to vector<16x8xf32>
    %189 = vector.extract_strided_slice %169 {offsets = [0, 72], sizes = [16, 8], strides = [1, 1]} : vector<16x96xf32> to vector<16x8xf32>
    %190 = vector.extract_strided_slice %169 {offsets = [0, 80], sizes = [16, 8], strides = [1, 1]} : vector<16x96xf32> to vector<16x8xf32>
    %191 = vector.extract_strided_slice %169 {offsets = [0, 88], sizes = [16, 8], strides = [1, 1]} : vector<16x96xf32> to vector<16x8xf32>
    %192 = vector.shape_cast %188 : vector<16x8xf32> to vector<1x16x8xf32>
    %193 = vector.shape_cast %189 : vector<16x8xf32> to vector<1x16x8xf32>
    %194 = vector.shape_cast %190 : vector<16x8xf32> to vector<1x16x8xf32>
    %195 = vector.shape_cast %191 : vector<16x8xf32> to vector<1x16x8xf32>
    %196 = tpu.concatenate %192, %193, %194, %195 in 0 : vector<1x16x8xf32>, vector<1x16x8xf32>, vector<1x16x8xf32>, vector<1x16x8xf32> -> vector<4x16x8xf32>
    %197 = arith.truncf %178 : vector<4x16x8xf32> to vector<4x16x8xbf16>
    %198 = arith.truncf %187 : vector<4x16x8xf32> to vector<4x16x8xbf16>
    "tpu.trace_start"() <{level = 10 : i32, message = "htd,hsd->hts"}> : () -> ()
    %cst_49 = arith.constant dense<0.000000e+00> : vector<4x16x16xf32>
    %199 = tpu.matmul %197, %198, %cst_49 {dimension_numbers = #tpu.dot_dimension_numbers<[2], [2], [1], [1], [0, 0, 0, 1, 1, 1], [0], [0]>} : vector<4x16x8xbf16>, vector<4x16x8xbf16>, vector<4x16x16xf32> -> vector<4x16x16xf32>
    "tpu.trace_stop"() : () -> ()
    %cst_50 = arith.constant 0.353553385 : f32
    %200 = vector.broadcast %cst_50 : f32 to vector<4x16x16xf32>
    %201 = arith.mulf %199, %200 : vector<4x16x16xf32>
    %202 = vector.shape_cast %0 : vector<16x16xf32> to vector<1x16x16xf32>
    %203 = vector.broadcast %202 : vector<1x16x16xf32> to vector<4x16x16xf32>
    %204 = arith.addf %201, %203 : vector<4x16x16xf32>
    %cst_51 = arith.constant dense<0xFF800000> : vector<4x16xf32>
    %205 = vector.multi_reduction <maximumf>, %204, %cst_51 [2] : vector<4x16x16xf32> to vector<4x16xf32>
    %206 = vector.shape_cast %205 : vector<4x16xf32> to vector<4x16x1xf32>
    %207 = vector.broadcast %206 : vector<4x16x1xf32> to vector<4x16x16xf32>
    %208 = arith.subf %204, %207 : vector<4x16x16xf32>
    %209 = math.exp %208 : vector<4x16x16xf32>
    %cst_52 = arith.constant dense<0.000000e+00> : vector<4x16xf32>
    %210 = vector.multi_reduction <add>, %209, %cst_52 [2] : vector<4x16x16xf32> to vector<4x16xf32>
    %211 = vector.shape_cast %210 : vector<4x16xf32> to vector<4x16x1xf32>
    %212 = tpu.reciprocal %211 {approx = true} : vector<4x16x1xf32> -> vector<4x16x1xf32>
    %213 = vector.broadcast %212 : vector<4x16x1xf32> to vector<4x16x16xf32>
    %214 = arith.mulf %209, %213 : vector<4x16x16xf32>
    %215 = arith.truncf %214 : vector<4x16x16xf32> to vector<4x16x16xbf16>
    %216 = arith.truncf %196 : vector<4x16x8xf32> to vector<4x16x8xbf16>
    "tpu.trace_start"() <{level = 10 : i32, message = "hts,hsd->htd"}> : () -> ()
    %cst_53 = arith.constant dense<0.000000e+00> : vector<4x16x8xf32>
    %217 = tpu.matmul %215, %216, %cst_53 {dimension_numbers = #tpu.dot_dimension_numbers<[2], [1], [1], [2], [0, 0, 0, 1, 1, 2], [0], [0]>} : vector<4x16x16xbf16>, vector<4x16x8xbf16>, vector<4x16x8xf32> -> vector<4x16x8xf32>
    "tpu.trace_stop"() : () -> ()
    %218 = vector.extract_strided_slice %217 {offsets = [0, 0, 0], sizes = [1, 16, 8], strides = [1, 1, 1]} : vector<4x16x8xf32> to vector<1x16x8xf32>
    %219 = vector.shape_cast %218 : vector<1x16x8xf32> to vector<16x8xf32>
    %220 = vector.extract_strided_slice %217 {offsets = [1, 0, 0], sizes = [1, 16, 8], strides = [1, 1, 1]} : vector<4x16x8xf32> to vector<1x16x8xf32>
    %221 = vector.shape_cast %220 : vector<1x16x8xf32> to vector<16x8xf32>
    %222 = vector.extract_strided_slice %217 {offsets = [2, 0, 0], sizes = [1, 16, 8], strides = [1, 1, 1]} : vector<4x16x8xf32> to vector<1x16x8xf32>
    %223 = vector.shape_cast %222 : vector<1x16x8xf32> to vector<16x8xf32>
    %224 = vector.extract_strided_slice %217 {offsets = [3, 0, 0], sizes = [1, 16, 8], strides = [1, 1, 1]} : vector<4x16x8xf32> to vector<1x16x8xf32>
    %225 = vector.shape_cast %224 : vector<1x16x8xf32> to vector<16x8xf32>
    %226 = tpu.concatenate %219, %221, %223, %225 in 1 : vector<16x8xf32>, vector<16x8xf32>, vector<16x8xf32>, vector<16x8xf32> -> vector<16x32xf32>
    %c192 = arith.constant 192 : index
    %c0_54 = arith.constant 0 : index
    %227 = vector.load %arg3[%c192, %c0_54] : memref<384x128xbf16, #tpu.memory_space<vmem>>, vector<32x32xbf16>
    %228 = arith.truncf %226 : vector<16x32xf32> to vector<16x32xbf16>
    %cst_55 = arith.constant dense<0.000000e+00> : vector<16x32xf32>
    %229 = tpu.matmul %228, %227, %cst_55 {dimension_numbers = #tpu.dot_dimension_numbers<[1], [0], [0], [1], [0, 0, 1, 1], [], []>} : vector<16x32xbf16>, vector<32x32xbf16>, vector<16x32xf32> -> vector<16x32xf32>
    %c11 = arith.constant 11 : index
    %c0_56 = arith.constant 0 : index
    %230 = vector.load %arg2[%c11, %c0_56] : memref<24x128xf32, #tpu.memory_space<vmem>>, vector<1x32xf32>
    %231 = vector.broadcast %230 : vector<1x32xf32> to vector<16x32xf32>
    %232 = arith.addf %229, %231 : vector<16x32xf32>
    %233 = arith.addf %232, %163 : vector<16x32xf32>
    %c12 = arith.constant 12 : index
    %c0_57 = arith.constant 0 : index
    %234 = vector.load %arg2[%c12, %c0_57] : memref<24x128xf32, #tpu.memory_space<vmem>>, vector<1x32xf32>
    %c13 = arith.constant 13 : index
    %c0_58 = arith.constant 0 : index
    %235 = vector.load %arg2[%c13, %c0_58] : memref<24x128xf32, #tpu.memory_space<vmem>>, vector<1x32xf32>
    %cst_59 = arith.constant dense<0.000000e+00> : vector<16xf32>
    %236 = vector.multi_reduction <add>, %233, %cst_59 [1] : vector<16x32xf32> to vector<16xf32>
    %237 = vector.shape_cast %236 : vector<16xf32> to vector<16x1xf32>
    %cst_60 = arith.constant 3.200000e+01 : f32
    %238 = vector.broadcast %cst_60 : f32 to vector<16x1xf32>
    %239 = arith.divf %237, %238 : vector<16x1xf32>
    %240 = vector.broadcast %239 : vector<16x1xf32> to vector<16x32xf32>
    %241 = arith.subf %233, %240 : vector<16x32xf32>
    %242 = arith.mulf %241, %241 : vector<16x32xf32>
    %cst_61 = arith.constant dense<0.000000e+00> : vector<16xf32>
    %243 = vector.multi_reduction <add>, %242, %cst_61 [1] : vector<16x32xf32> to vector<16xf32>
    %244 = vector.shape_cast %243 : vector<16xf32> to vector<16x1xf32>
    %cst_62 = arith.constant 3.200000e+01 : f32
    %245 = vector.broadcast %cst_62 : f32 to vector<16x1xf32>
    %246 = arith.divf %244, %245 : vector<16x1xf32>
    %cst_63 = arith.constant 9.99999974E-6 : f32
    %247 = vector.broadcast %cst_63 : f32 to vector<16x1xf32>
    %248 = arith.addf %246, %247 : vector<16x1xf32>
    %249 = math.rsqrt %248 : vector<16x1xf32>
    %250 = vector.broadcast %249 : vector<16x1xf32> to vector<16x32xf32>
    %251 = arith.mulf %241, %250 : vector<16x32xf32>
    %252 = vector.broadcast %234 : vector<1x32xf32> to vector<16x32xf32>
    %253 = arith.mulf %251, %252 : vector<16x32xf32>
    %254 = vector.broadcast %235 : vector<1x32xf32> to vector<16x32xf32>
    %255 = arith.addf %253, %254 : vector<16x32xf32>
    %c224 = arith.constant 224 : index
    %c0_64 = arith.constant 0 : index
    %256 = vector.load %arg3[%c224, %c0_64] : memref<384x128xbf16, #tpu.memory_space<vmem>>, vector<32x64xbf16>
    %257 = arith.truncf %255 : vector<16x32xf32> to vector<16x32xbf16>
    %cst_65 = arith.constant dense<0.000000e+00> : vector<16x64xf32>
    %258 = tpu.matmul %257, %256, %cst_65 {dimension_numbers = #tpu.dot_dimension_numbers<[1], [0], [0], [1], [0, 0, 1, 1], [], []>} : vector<16x32xbf16>, vector<32x64xbf16>, vector<16x64xf32> -> vector<16x64xf32>
    %c14 = arith.constant 14 : index
    %c0_66 = arith.constant 0 : index
    %259 = vector.load %arg2[%c14, %c0_66] : memref<24x128xf32, #tpu.memory_space<vmem>>, vector<1x64xf32>
    %260 = vector.broadcast %259 : vector<1x64xf32> to vector<16x64xf32>
    %261 = arith.addf %258, %260 : vector<16x64xf32>
    %cst_67 = arith.constant 5.000000e-01 : f32
    %262 = vector.broadcast %cst_67 : f32 to vector<16x64xf32>
    %263 = arith.mulf %262, %261 : vector<16x64xf32>
    %cst_68 = arith.constant 4.471500e-02 : f32
    %264 = vector.broadcast %cst_68 : f32 to vector<16x64xf32>
    %265 = arith.mulf %264, %261 : vector<16x64xf32>
    %266 = arith.mulf %265, %261 : vector<16x64xf32>
    %267 = arith.mulf %266, %261 : vector<16x64xf32>
    %268 = arith.addf %261, %267 : vector<16x64xf32>
    %cst_69 = arith.constant 0.797884583 : f32
    %269 = vector.broadcast %cst_69 : f32 to vector<16x64xf32>
    %270 = arith.mulf %269, %268 : vector<16x64xf32>
    %271 = math.tanh %270 : vector<16x64xf32>
    %cst_70 = arith.constant 1.000000e+00 : f32
    %272 = vector.broadcast %cst_70 : f32 to vector<16x64xf32>
    %273 = arith.addf %272, %271 : vector<16x64xf32>
    %274 = arith.mulf %263, %273 : vector<16x64xf32>
    %c256 = arith.constant 256 : index
    %c0_71 = arith.constant 0 : index
    %275 = vector.load %arg3[%c256, %c0_71] : memref<384x128xbf16, #tpu.memory_space<vmem>>, vector<64x32xbf16>
    %276 = arith.truncf %274 : vector<16x64xf32> to vector<16x64xbf16>
    %cst_72 = arith.constant dense<0.000000e+00> : vector<16x32xf32>
    %277 = tpu.matmul %276, %275, %cst_72 {dimension_numbers = #tpu.dot_dimension_numbers<[1], [0], [0], [1], [0, 0, 1, 1], [], []>} : vector<16x64xbf16>, vector<64x32xbf16>, vector<16x32xf32> -> vector<16x32xf32>
    %c15 = arith.constant 15 : index
    %c0_73 = arith.constant 0 : index
    %278 = vector.load %arg2[%c15, %c0_73] : memref<24x128xf32, #tpu.memory_space<vmem>>, vector<1x32xf32>
    %279 = vector.broadcast %278 : vector<1x32xf32> to vector<16x32xf32>
    %280 = arith.addf %277, %279 : vector<16x32xf32>
    %281 = arith.addf %280, %255 : vector<16x32xf32>
    %c16 = arith.constant 16 : index
    %c0_74 = arith.constant 0 : index
    %282 = vector.load %arg2[%c16, %c0_74] : memref<24x128xf32, #tpu.memory_space<vmem>>, vector<1x32xf32>
    %c17 = arith.constant 17 : index
    %c0_75 = arith.constant 0 : index
    %283 = vector.load %arg2[%c17, %c0_75] : memref<24x128xf32, #tpu.memory_space<vmem>>, vector<1x32xf32>
    %cst_76 = arith.constant dense<0.000000e+00> : vector<16xf32>
    %284 = vector.multi_reduction <add>, %281, %cst_76 [1] : vector<16x32xf32> to vector<16xf32>
    %285 = vector.shape_cast %284 : vector<16xf32> to vector<16x1xf32>
    %cst_77 = arith.constant 3.200000e+01 : f32
    %286 = vector.broadcast %cst_77 : f32 to vector<16x1xf32>
    %287 = arith.divf %285, %286 : vector<16x1xf32>
    %288 = vector.broadcast %287 : vector<16x1xf32> to vector<16x32xf32>
    %289 = arith.subf %281, %288 : vector<16x32xf32>
    %290 = arith.mulf %289, %289 : vector<16x32xf32>
    %cst_78 = arith.constant dense<0.000000e+00> : vector<16xf32>
    %291 = vector.multi_reduction <add>, %290, %cst_78 [1] : vector<16x32xf32> to vector<16xf32>
    %292 = vector.shape_cast %291 : vector<16xf32> to vector<16x1xf32>
    %cst_79 = arith.constant 3.200000e+01 : f32
    %293 = vector.broadcast %cst_79 : f32 to vector<16x1xf32>
    %294 = arith.divf %292, %293 : vector<16x1xf32>
    %cst_80 = arith.constant 9.99999974E-6 : f32
    %295 = vector.broadcast %cst_80 : f32 to vector<16x1xf32>
    %296 = arith.addf %294, %295 : vector<16x1xf32>
    %297 = math.rsqrt %296 : vector<16x1xf32>
    %298 = vector.broadcast %297 : vector<16x1xf32> to vector<16x32xf32>
    %299 = arith.mulf %289, %298 : vector<16x32xf32>
    %300 = vector.broadcast %282 : vector<1x32xf32> to vector<16x32xf32>
    %301 = arith.mulf %299, %300 : vector<16x32xf32>
    %302 = vector.broadcast %283 : vector<1x32xf32> to vector<16x32xf32>
    %303 = arith.addf %301, %302 : vector<16x32xf32>
    %304 = vector.extract_strided_slice %303 {offsets = [0, 0], sizes = [1, 32], strides = [1, 1]} : vector<16x32xf32> to vector<1x32xf32>
    %305 = vector.extract_strided_slice %303 {offsets = [8, 0], sizes = [1, 32], strides = [1, 1]} : vector<16x32xf32> to vector<1x32xf32>
    %306 = tpu.concatenate %304, %305 in 0 : vector<1x32xf32>, vector<1x32xf32> -> vector<2x32xf32>
    %c320 = arith.constant 320 : index
    %c0_81 = arith.constant 0 : index
    %307 = vector.load %arg3[%c320, %c0_81] : memref<384x128xbf16, #tpu.memory_space<vmem>>, vector<32x32xbf16>
    %308 = arith.truncf %306 : vector<2x32xf32> to vector<2x32xbf16>
    %cst_82 = arith.constant dense<0.000000e+00> : vector<2x32xf32>
    %309 = tpu.matmul %308, %307, %cst_82 {dimension_numbers = #tpu.dot_dimension_numbers<[1], [0], [0], [1], [0, 0, 1, 1], [], []>} : vector<2x32xbf16>, vector<32x32xbf16>, vector<2x32xf32> -> vector<2x32xf32>
    %c18 = arith.constant 18 : index
    %c0_83 = arith.constant 0 : index
    %310 = vector.load %arg2[%c18, %c0_83] : memref<24x128xf32, #tpu.memory_space<vmem>>, vector<1x32xf32>
    %311 = vector.broadcast %310 : vector<1x32xf32> to vector<2x32xf32>
    %312 = arith.addf %309, %311 : vector<2x32xf32>
    %313 = math.tanh %312 : vector<2x32xf32>
    %cst_84 = arith.constant 0.000000e+00 : f32
    %314 = vector.broadcast %cst_84 : f32 to vector<6x32xf32>
    %315 = tpu.concatenate %313, %314 in 0 : vector<2x32xf32>, vector<6x32xf32> -> vector<8x32xf32>
    %c352 = arith.constant 352 : index
    %c0_85 = arith.constant 0 : index
    %316 = vector.load %arg3[%c352, %c0_85] : memref<384x128xbf16, #tpu.memory_space<vmem>>, vector<32x128xbf16>
    %317 = arith.truncf %315 : vector<8x32xf32> to vector<8x32xbf16>
    %cst_86 = arith.constant dense<0.000000e+00> : vector<8x128xf32>
    %318 = tpu.matmul %317, %316, %cst_86 {dimension_numbers = #tpu.dot_dimension_numbers<[1], [0], [0], [1], [0, 0, 1, 1], [], []>} : vector<8x32xbf16>, vector<32x128xbf16>, vector<8x128xf32> -> vector<8x128xf32>
    %c19 = arith.constant 19 : index
    %c0_87 = arith.constant 0 : index
    %319 = vector.load %arg2[%c19, %c0_87] : memref<24x128xf32, #tpu.memory_space<vmem>>, vector<1x128xf32>
    %320 = vector.broadcast %319 : vector<1x128xf32> to vector<8x128xf32>
    %321 = arith.addf %318, %320 : vector<8x128xf32>
    %c0_88 = arith.constant 0 : index
    %c0_89 = arith.constant 0 : index
    %322 = vector.load %arg4[%c0_88, %c0_89] : memref<8x128xf32, #tpu.memory_space<vmem>>, vector<8x128xf32>
    tpu.vector_store %arg4[%c0_88, %c0_89], %321 {strides = array<i32>} : memref<8x128xf32, #tpu.memory_space<vmem>>, vector<8x128xf32>,
    return
  }
}

</mosaic_0001>

<llo_original>
// kernel: tpu_custom_call.1
$region0: #{tpu_custom_call.1}
  #allocation0 [shape = 'u32[]', space=smem, size = 0x4, offset = 0x4, fixed_abs, tag = 'smem constant byte address 0x4 - core index']
  #allocation1 [shape = 'u32[72,128]{1,0:T(1,128)}', space=vmem, size = 0x9000, scoped, tag = 'internal scratch']
  %s0 = inlined_call_operand.hbm [shape: f32[16,32], index: 0, kind: input, shape index: {}]
  %s1 = inlined_call_operand.hbm [shape: f32[16,16], index: 1, kind: input, shape index: {}]
  %s2 = inlined_call_operand.hbm [shape: f32[24,128], index: 2, kind: input, shape index: {}]
  %s3 = inlined_call_operand.hbm [shape: bf16[384,128], index: 3, kind: input, shape index: {}]
  %s4 = inlined_call_operand.hbm [shape: f32[8,128], index: 4, kind: output, shape index: {}]
  %s5 = sld [smem:[#allocation0]]
  $region42: #{tpu_custom_call.1} parent=0
    _
  %s7 = ssub.s32 1, %s5
  %s8 = scalar_select 0, %s7, %s5
  $region1: #{tpu_custom_call.1} parent=0
    #allocation2 [shape = 'u8[8192]{0}', space=vmem, size = 0x2000, scoped, tag = 'input window, operand 0, single buffered']
    #allocation3 [shape = 's32[1]{0}', space=sflag, size = 0x4, scoped, tag = 'scoped memory for tpu_custom_call.1']
    #allocation4 [shape = 's32[1]{0}', space=sflag, size = 0x4, scoped, tag = 'scoped memory for tpu_custom_call.1']
    #allocation5 [shape = 'u8[8192]{0}', space=vmem, size = 0x2000, scoped, tag = 'input window, operand 1, single buffered']
    #allocation6 [shape = 's32[1]{0}', space=sflag, size = 0x4, scoped, tag = 'scoped memory for tpu_custom_call.1']
    #allocation7 [shape = 'u8[12288]{0}', space=vmem, size = 0x3000, scoped, tag = 'input window, operand 2, single buffered']
    #allocation8 [shape = 'u8[98304]{0}', space=vmem, size = 0x18000, scoped, tag = 'input window, operand 3, single buffered']
    #allocation9 [shape = 's32[1]{0}', space=sflag, size = 0x4, scoped, tag = 'scoped memory for tpu_custom_call.1']
    #allocation10 [shape = 'u8[4096]{0}', space=vmem, size = 0x1000, scoped, tag = 'output window, operand 0, single buffered']
    %9 = vsyncpa [#allocation3], 0
    %10 = vsyncpa [#allocation6], 0
    %11 = vsyncpa [#allocation9], 0
    %12 = vsyncpa [#allocation4], 0
    // Predicated region
    $region2: #{tpu_custom_call.1} parent=1 // pred_check
      _
    $region3: #{tpu_custom_call.1} parent=1 // pred_check_branch
      %14 = sbr.rel (0) target = $region5
    $region4: #{tpu_custom_call.1} parent=1 // pred_region
      %16 = vsyncadd [#allocation3], 0
      %s17 = sshll.u32 %s0, 4
      %s18 = int_to_ptr.hbm [resolvable:$true] %s17
      %s19 = sshll.u32 [#allocation2], 4
      %s20 = int_to_ptr.vmem [resolvable:$true] %s19
      %25 = dma.hbm_to_vmem [thread:$0]  %s18, 256, %s20, [#allocation3], 128, 128, 8
    $region5: #{tpu_custom_call.1} parent=1 // pred_fallthru
      _
    // Predicated region
    $region6: #{tpu_custom_call.1} parent=1 // pred_check
      _
    $region7: #{tpu_custom_call.1} parent=1 // pred_check_branch
      %27 = sbr.rel (0) target = $region9
    $region8: #{tpu_custom_call.1} parent=1 // pred_region
      %29 = vsyncadd [#allocation6], 0
      %s30 = sshll.u32 %s1, 4
      %s31 = int_to_ptr.hbm [resolvable:$true] %s30
      %s32 = sshll.u32 [#allocation5], 4
      %s33 = int_to_ptr.vmem [resolvable:$true] %s32
      %38 = dma.hbm_to_vmem [thread:$0]  %s31, 256, %s33, [#allocation6], 128, 128, 8
    $region9: #{tpu_custom_call.1} parent=1 // pred_fallthru
      _
    // Predicated region
    $region10: #{tpu_custom_call.1} parent=1 // pred_check
      _
    $region11: #{tpu_custom_call.1} parent=1 // pred_check_branch
      %40 = sbr.rel (0) target = $region13
    $region12: #{tpu_custom_call.1} parent=1 // pred_region
      %42 = vsyncadd [#allocation6], 0
      %s43 = sshll.u32 %s2, 4
      %s44 = int_to_ptr.hbm [resolvable:$true] %s43
      %s45 = sshll.u32 [#allocation7], 4
      %s46 = int_to_ptr.vmem [resolvable:$true] %s45
      %51 = dma.hbm_to_vmem [thread:$0]  %s44, 384, %s46, [#allocation6], 128, 128, 8
    $region13: #{tpu_custom_call.1} parent=1 // pred_fallthru
      _
    // Predicated region
    $region14: #{tpu_custom_call.1} parent=1 // pred_check
      _
    $region15: #{tpu_custom_call.1} parent=1 // pred_check_branch
      %53 = sbr.rel (0) target = $region17
    $region16: #{tpu_custom_call.1} parent=1 // pred_region
      %55 = vsyncadd [#allocation9], 0
      %s56 = sshll.u32 %s3, 4
      %s57 = int_to_ptr.hbm [resolvable:$true] %s56
      %s58 = sshll.u32 [#allocation8], 4
      %s59 = int_to_ptr.vmem [resolvable:$true] %s58
      %64 = dma.hbm_to_vmem [thread:$0]  %s57, 3072, %s59, [#allocation9], 64, 64, 4
    $region17: #{tpu_custom_call.1} parent=1 // pred_fallthru
      _
    // Predicated region
    $region18: #{tpu_custom_call.1} parent=1 // pred_check
      _
    $region19: #{tpu_custom_call.1} parent=1 // pred_check_branch
      %66 = sbr.rel (0) target = $region21
    $region20: #{tpu_custom_call.1} parent=1 // pred_region
      %68 = dma.done [#allocation3], 256
    $region21: #{tpu_custom_call.1} parent=1 // pred_fallthru
      _
    // Predicated region
    $region22: #{tpu_custom_call.1} parent=1 // pred_check
      _
    $region23: #{tpu_custom_call.1} parent=1 // pred_check_branch
      %70 = sbr.rel (0) target = $region25
    $region24: #{tpu_custom_call.1} parent=1 // pred_region
      %72 = dma.done [#allocation6], 256
    $region25: #{tpu_custom_call.1} parent=1 // pred_fallthru
      _
    // Predicated region
    $region26: #{tpu_custom_call.1} parent=1 // pred_check
      _
    $region27: #{tpu_custom_call.1} parent=1 // pred_check_branch
      %74 = sbr.rel (0) target = $region29
    $region28: #{tpu_custom_call.1} parent=1 // pred_region
      %76 = dma.done [#allocation6], 384
    $region29: #{tpu_custom_call.1} parent=1 // pred_fallthru
      _
    // Predicated region
    $region30: #{tpu_custom_call.1} parent=1 // pred_check
      _
    $region31: #{tpu_custom_call.1} parent=1 // pred_check_branch
      %78 = sbr.rel (0) target = $region33
    $region32: #{tpu_custom_call.1} parent=1 // pred_region
      %80 = dma.done [#allocation9], 3072
    $region33: #{tpu_custom_call.1} parent=1 // pred_fallthru
      _
    %v82 = vld [vmem:[#allocation5] sm:$0xff]
    %v83 = vld [vmem:[#allocation5 + $0x8] sm:$0xff]
    %v84 = vld [vmem:[#allocation2] sm:$0xff]
    %v85 = vld [vmem:[#allocation2 + $0x8] sm:$0xff]
    %v86 = vld [vmem:[#allocation7] sm:$0x1]
    %v87 = vld [vmem:[#allocation7 + $0x1] sm:$0x1]
    %vm88 = vcmask 261120
    %v89 = vsel %vm88, %v84, 0.0
    %90 = vadd.xlane.f32.xlu0 %v89
    %v91 = vpop.xlane.xlu0 %90
    %v92 = vsel %vm88, %v85, 0.0
    %93 = vadd.xlane.f32.xlu0 %v92
    %v94 = vpop.xlane.xlu0 %93
    %v95 = vrcp.pop 32.0
    %v96 = vmul.f32 32.0, %v95
    %v97 = vsub.f32 1.0, %v96
    %v98 = vmul.f32 %v95, %v97
    %v99 = vadd.f32 %v95, %v98
    %vm100 = vweird.f32 %v95
    %v101 = vsel %vm100, %v95, %v99
    %v102 = vmul.f32 %v91, %v101
    %v103 = vmul.f32 %v94, %v101
    %v104 = vsub.f32 %v84, %v102
    %v105 = vsub.f32 %v85, %v103
    %v106 = vmul.f32 %v104, %v104
    %v107 = vmul.f32 %v105, %v105
    %v108 = vsel %vm88, %v106, 0.0
    %109 = vadd.xlane.f32.xlu0 %v108
    %v110 = vpop.xlane.xlu0 %109
    %v111 = vsel %vm88, %v107, 0.0
    %112 = vadd.xlane.f32.xlu0 %v111
    %v113 = vpop.xlane.xlu0 %112
    %v114 = vmul.f32 %v110, %v101
    %v115 = vmul.f32 %v113, %v101
    %v116 = vadd.f32 %v114, 1e-05
    %v117 = vadd.f32 %v115, 1e-05
    %v118 = vrsqrt.pop %v116
    %v119 = vmul.f32 %v118, %v116
    %v120 = vmul.f32 %v119, %v118
    %v121 = vmul.f32 0.5, %v120
    %v122 = vsub.f32 1.5, %v121
    %v123 = vmul.f32 %v118, %v122
    %vm124 = vweird.f32 %v116
    %vm125 = vweird.f32 %v118
    %vm126 = vmor %vm124, %vm125
    %v127 = vsel %vm126, %v118, %v123
    %v128 = vrsqrt.pop %v117
    %v129 = vmul.f32 %v128, %v117
    %v130 = vmul.f32 %v129, %v128
    %v131 = vmul.f32 0.5, %v130
    %v132 = vsub.f32 1.5, %v131
    %v133 = vmul.f32 %v128, %v132
    %vm134 = vweird.f32 %v117
    %vm135 = vweird.f32 %v128
    %vm136 = vmor %vm134, %vm135
    %v137 = vsel %vm136, %v128, %v133
    %v138 = vmul.f32 %v104, %v127
    %v139 = vmul.f32 %v105, %v137
    %v140 = vperm.slane %v86, 0
    %v141 = vmul.f32 %v138, %v140
    %v142 = vmul.f32 %v139, %v140
    %v143 = vperm.slane %v87, 0
    %v144 = vadd.f32 %v141, %v143
    %v145 = vadd.f32 %v142, %v143
    %v146 = vld [vmem:[#allocation8] sm:$0xf]
    %v147 = vld [vmem:[#allocation8 + $0x4] sm:$0xf]
    %v148 = vld [vmem:[#allocation8 + $0x8] sm:$0xf]
    %v149 = vld [vmem:[#allocation8 + $0xc] sm:$0xf]
    %v150 = vpack.c.bf16 %v145, %v144
    %v151 = vld [vmem:[#allocation7 + $0x2] sm:$0x1]
    %v152 = vperm.slane %v151, 0
    %v157 = vunpack.c.l.b16 %v146
    %v158 = vunpack.c.l.b16 %v147
    %v159 = vunpack.c.l.b16 %v148
    %v160 = vunpack.c.l.b16 %v149
    %v161 = vpack.c.b16 %v158, %v157
    %v162 = vpack.c.b16 %v160, %v159
    %v166 = vsel %vm88, %v150, 0
    %168 = vmatpush.bf16.msra.mxu0 0
    %169 = vmatpush.bf16.msra.mxu0 0
    %170 = vmatpush.bf16.msra.mxu0 0
    %171 = vmatpush.bf16.msra.mxu0 0
    %172 = vmatpush.bf16.msra.mxu0 0
    %173 = vmatpush.bf16.msra.mxu0 0
    %174 = vmatpush.bf16.msra.mxu0 %v162
    %175 = vmatpush.bf16.msra.mxu0 %v161
    %176 = vmatmul.bf16.gmra.mxu0 %v166
    %v177 = vpop.f32.mrf.mxu0
    %v178 = vadd.f32 %v152, %v177
    %v179 = vpop.f32.mrf.mxu0
    %v180 = vadd.f32 %v152, %v179
    %181 = vdwg.mxu0
    %184 = vrot.lane.b32.xlu0 %v178, 120
    %v185 = vpop.permute.xlu0 %184
    %186 = vrot.lane.b32.xlu0 %v180, 120
    %v187 = vpop.permute.xlu0 %186
    %190 = vrot.lane.b32.xlu0 %v178, 112
    %v191 = vpop.permute.xlu0 %190
    %192 = vrot.lane.b32.xlu0 %v180, 112
    %v193 = vpop.permute.xlu0 %192
    %196 = vrot.lane.b32.xlu0 %v178, 104
    %v197 = vpop.permute.xlu0 %196
    %198 = vrot.lane.b32.xlu0 %v180, 104
    %v199 = vpop.permute.xlu0 %198
    %v202 = vpack.c.bf16 %v178, %v178
    %v203 = vpack.c.bf16 %v180, %v180
    %v204 = vpack.c.bf16 %v185, %v185
    %v205 = vpack.c.bf16 %v187, %v187
    %v206 = vpack.c.bf16 %v191, %v191
    %v207 = vpack.c.bf16 %v193, %v193
    %v208 = vpack.c.bf16 %v197, %v197
    %v209 = vpack.c.bf16 %v199, %v199
    %v212 = vunpack.c.l.b16 %v202
    %v213 = vunpack.c.l.b16 %v203
    %v214 = vpack.c.b16 %v213, %v212
    %215 = vrot.lane.b32.xlu0 %v214, 96
    %v216 = vpop.permute.xlu0 %215
    %vm217 = vcmask 64512
    %v219 = vsel %vm217, %v214, 0
    %v222 = vsel %vm217, %v216, 0
    %224 = vmatpush.bf16.xpose.msra.mxu0 0
    %225 = vmatpush.bf16.xpose.msra.mxu0 0
    %226 = vmatpush.bf16.xpose.msra.mxu0 0
    %227 = vmatpush.bf16.xpose.msra.mxu0 0
    %228 = vmatpush.bf16.xpose.msra.mxu0 0
    %229 = vmatpush.bf16.xpose.msra.mxu0 0
    %230 = vmatpush.bf16.xpose.msra.mxu0 0
    %231 = vmatpush.bf16.xpose.msra.mxu0 %v222
    %232 = vmatmul.bf16.gmra.mxu0 %v219
    %v233 = vpop.f32.mrf.mxu0
    %v234 = vadd.f32 0.0, %v233
    %v235 = vpop.f32.mrf.mxu0
    %v236 = vadd.f32 0.0, %v235
    %237 = vdwg.mxu0
    %v240 = vunpack.c.l.b16 %v204
    %v241 = vunpack.c.l.b16 %v205
    %v242 = vpack.c.b16 %v241, %v240
    %243 = vrot.lane.b32.xlu0 %v242, 96
    %v244 = vpop.permute.xlu0 %243
    %v246 = vsel %vm217, %v242, 0
    %v249 = vsel %vm217, %v244, 0
    %251 = vmatpush.bf16.xpose.msra.mxu0 0
    %252 = vmatpush.bf16.xpose.msra.mxu0 0
    %253 = vmatpush.bf16.xpose.msra.mxu0 0
    %254 = vmatpush.bf16.xpose.msra.mxu0 0
    %255 = vmatpush.bf16.xpose.msra.mxu0 0
    %256 = vmatpush.bf16.xpose.msra.mxu0 0
    %257 = vmatpush.bf16.xpose.msra.mxu0 0
    %258 = vmatpush.bf16.xpose.msra.mxu0 %v249
    %259 = vmatmul.bf16.gmra.mxu0 %v246
    %v260 = vpop.f32.mrf.mxu0
    %v261 = vadd.f32 0.0, %v260
    %v262 = vpop.f32.mrf.mxu0
    %v263 = vadd.f32 0.0, %v262
    %264 = vdwg.mxu0
    %v267 = vunpack.c.l.b16 %v206
    %v268 = vunpack.c.l.b16 %v207
    %v269 = vpack.c.b16 %v268, %v267
    %270 = vrot.lane.b32.xlu0 %v269, 96
    %v271 = vpop.permute.xlu0 %270
    %v273 = vsel %vm217, %v269, 0
    %v276 = vsel %vm217, %v271, 0
    %278 = vmatpush.bf16.xpose.msra.mxu0 0
    %279 = vmatpush.bf16.xpose.msra.mxu0 0
    %280 = vmatpush.bf16.xpose.msra.mxu0 0
    %281 = vmatpush.bf16.xpose.msra.mxu0 0
    %282 = vmatpush.bf16.xpose.msra.mxu0 0
    %283 = vmatpush.bf16.xpose.msra.mxu0 0
    %284 = vmatpush.bf16.xpose.msra.mxu0 0
    %285 = vmatpush.bf16.xpose.msra.mxu0 %v276
    %286 = vmatmul.bf16.gmra.mxu0 %v273
    %v287 = vpop.f32.mrf.mxu0
    %v288 = vadd.f32 0.0, %v287
    %v289 = vpop.f32.mrf.mxu0
    %v290 = vadd.f32 0.0, %v289
    %291 = vdwg.mxu0
    %v294 = vunpack.c.l.b16 %v208
    %v295 = vunpack.c.l.b16 %v209
    %v296 = vpack.c.b16 %v295, %v294
    %297 = vrot.lane.b32.xlu0 %v296, 96
    %v298 = vpop.permute.xlu0 %297
    %v300 = vsel %vm217, %v296, 0
    %v303 = vsel %vm217, %v298, 0
    %305 = vmatpush.bf16.xpose.msra.mxu0 0
    %306 = vmatpush.bf16.xpose.msra.mxu0 0
    %307 = vmatpush.bf16.xpose.msra.mxu0 0
    %308 = vmatpush.bf16.xpose.msra.mxu0 0
    %309 = vmatpush.bf16.xpose.msra.mxu0 0
    %310 = vmatpush.bf16.xpose.msra.mxu0 0
    %311 = vmatpush.bf16.xpose.msra.mxu0 0
    %312 = vmatpush.bf16.xpose.msra.mxu0 %v303
    %313 = vmatmul.bf16.gmra.mxu0 %v300
    %v314 = vpop.f32.mrf.mxu0
    %v315 = vadd.f32 0.0, %v314
    %v316 = vpop.f32.mrf.mxu0
    %v317 = vadd.f32 0.0, %v316
    %318 = vdwg.mxu0
    %v319 = vmul.f32 %v234, 0.35355338
    %v320 = vmul.f32 %v236, 0.35355338
    %v321 = vmul.f32 %v261, 0.35355338
    %v322 = vmul.f32 %v263, 0.35355338
    %v323 = vmul.f32 %v288, 0.35355338
    %v324 = vmul.f32 %v290, 0.35355338
    %v325 = vmul.f32 %v315, 0.35355338
    %v326 = vmul.f32 %v317, 0.35355338
    %v327 = vadd.f32 %v319, %v82
    %v328 = vadd.f32 %v320, %v83
    %v329 = vadd.f32 %v321, %v82
    %v330 = vadd.f32 %v322, %v83
    %v331 = vadd.f32 %v323, %v82
    %v332 = vadd.f32 %v324, %v83
    %v333 = vadd.f32 %v325, %v82
    %v334 = vadd.f32 %v326, %v83
    %vm335 = vcmask 130048
    %v336 = vsel %vm335, %v327, -inf
    %337 = vmax.xlane.f32.xlu0 %v336
    %v338 = vpop.xlane.xlu0 %337
    %v339 = vsel %vm335, %v328, -inf
    %340 = vmax.xlane.f32.xlu0 %v339
    %v341 = vpop.xlane.xlu0 %340
    %v342 = vsel %vm335, %v329, -inf
    %343 = vmax.xlane.f32.xlu0 %v342
    %v344 = vpop.xlane.xlu0 %343
    %v345 = vsel %vm335, %v330, -inf
    %346 = vmax.xlane.f32.xlu0 %v345
    %v347 = vpop.xlane.xlu0 %346
    %v348 = vsel %vm335, %v331, -inf
    %349 = vmax.xlane.f32.xlu0 %v348
    %v350 = vpop.xlane.xlu0 %349
    %v351 = vsel %vm335, %v332, -inf
    %352 = vmax.xlane.f32.xlu0 %v351
    %v353 = vpop.xlane.xlu0 %352
    %v354 = vsel %vm335, %v333, -inf
    %355 = vmax.xlane.f32.xlu0 %v354
    %v356 = vpop.xlane.xlu0 %355
    %v357 = vsel %vm335, %v334, -inf
    %358 = vmax.xlane.f32.xlu0 %v357
    %v359 = vpop.xlane.xlu0 %358
    %v360 = vsub.f32 %v327, %v338
    %v361 = vsub.f32 %v328, %v341
    %v362 = vsub.f32 %v329, %v344
    %v363 = vsub.f32 %v330, %v347
    %v364 = vsub.f32 %v331, %v350
    %v365 = vsub.f32 %v332, %v353
    %v366 = vsub.f32 %v333, %v356
    %v367 = vsub.f32 %v334, %v359
    %v368 = vmul.f32 %v360, 1.442695
    %v369 = vpow.pop %v368
    %v370 = vmul.f32 %v361, 1.442695
    %v371 = vpow.pop %v370
    %v372 = vmul.f32 %v362, 1.442695
    %v373 = vpow.pop %v372
    %v374 = vmul.f32 %v363, 1.442695
    %v375 = vpow.pop %v374
    %v376 = vmul.f32 %v364, 1.442695
    %v377 = vpow.pop %v376
    %v378 = vmul.f32 %v365, 1.442695
    %v379 = vpow.pop %v378
    %v380 = vmul.f32 %v366, 1.442695
    %v381 = vpow.pop %v380
    %v382 = vmul.f32 %v367, 1.442695
    %v383 = vpow.pop %v382
    %v384 = vsel %vm335, %v369, 0.0
    %385 = vadd.xlane.f32.xlu0 %v384
    %v386 = vpop.xlane.xlu0 %385
    %v387 = vsel %vm335, %v371, 0.0
    %388 = vadd.xlane.f32.xlu0 %v387
    %v389 = vpop.xlane.xlu0 %388
    %v390 = vsel %vm335, %v373, 0.0
    %391 = vadd.xlane.f32.xlu0 %v390
    %v392 = vpop.xlane.xlu0 %391
    %v393 = vsel %vm335, %v375, 0.0
    %394 = vadd.xlane.f32.xlu0 %v393
    %v395 = vpop.xlane.xlu0 %394
    %v396 = vsel %vm335, %v377, 0.0
    %397 = vadd.xlane.f32.xlu0 %v396
    %v398 = vpop.xlane.xlu0 %397
    %v399 = vsel %vm335, %v379, 0.0
    %400 = vadd.xlane.f32.xlu0 %v399
    %v401 = vpop.xlane.xlu0 %400
    %v402 = vsel %vm335, %v381, 0.0
    %403 = vadd.xlane.f32.xlu0 %v402
    %v404 = vpop.xlane.xlu0 %403
    %v405 = vsel %vm335, %v383, 0.0
    %406 = vadd.xlane.f32.xlu0 %v405
    %v407 = vpop.xlane.xlu0 %406
    %v408 = vrcp.pop %v386
    %v409 = vrcp.pop %v389
    %v410 = vrcp.pop %v392
    %v411 = vrcp.pop %v395
    %v412 = vrcp.pop %v398
    %v413 = vrcp.pop %v401
    %v414 = vrcp.pop %v404
    %v415 = vrcp.pop %v407
    %v416 = vmul.f32 %v369, %v408
    %v417 = vmul.f32 %v371, %v409
    %v418 = vmul.f32 %v373, %v410
    %v419 = vmul.f32 %v375, %v411
    %v420 = vmul.f32 %v377, %v412
    %v421 = vmul.f32 %v379, %v413
    %v422 = vmul.f32 %v381, %v414
    %v423 = vmul.f32 %v383, %v415
    %v424 = vpack.c.bf16 %v416, %v416
    %v425 = vpack.c.bf16 %v417, %v417
    %v426 = vpack.c.bf16 %v418, %v418
    %v427 = vpack.c.bf16 %v419, %v419
    %v428 = vpack.c.bf16 %v420, %v420
    %v429 = vpack.c.bf16 %v421, %v421
    %v430 = vpack.c.bf16 %v422, %v422
    %v431 = vpack.c.bf16 %v423, %v423
    %v434 = vunpack.c.l.b16 %v424
    %v435 = vunpack.c.l.b16 %v425
    %v436 = vpack.c.b16 %v435, %v434
    %437 = vrot.lane.b32.xlu0 %v214, 64
    %v438 = vpop.permute.xlu0 %437
    %v441 = vsel %vm335, %v436, 0
    %443 = vmatpush.bf16.msra.mxu0 0
    %444 = vmatpush.bf16.msra.mxu0 0
    %445 = vmatpush.bf16.msra.mxu0 0
    %446 = vmatpush.bf16.msra.mxu0 0
    %447 = vmatpush.bf16.msra.mxu0 0
    %448 = vmatpush.bf16.msra.mxu0 0
    %449 = vmatpush.bf16.msra.mxu0 0
    %450 = vmatpush.bf16.msra.mxu0 %v438
    %451 = vmatmul.bf16.gmra.mxu0 %v441
    %v452 = vpop.f32.mrf.mxu0
    %v453 = vadd.f32 0.0, %v452
    %v454 = vpop.f32.mrf.mxu0
    %v455 = vadd.f32 0.0, %v454
    %456 = vdwg.mxu0
    %v459 = vunpack.c.l.b16 %v426
    %v460 = vunpack.c.l.b16 %v427
    %v461 = vpack.c.b16 %v460, %v459
    %462 = vrot.lane.b32.xlu0 %v242, 64
    %v463 = vpop.permute.xlu0 %462
    %v466 = vsel %vm335, %v461, 0
    %468 = vmatpush.bf16.msra.mxu0 0
    %469 = vmatpush.bf16.msra.mxu0 0
    %470 = vmatpush.bf16.msra.mxu0 0
    %471 = vmatpush.bf16.msra.mxu0 0
    %472 = vmatpush.bf16.msra.mxu0 0
    %473 = vmatpush.bf16.msra.mxu0 0
    %474 = vmatpush.bf16.msra.mxu0 0
    %475 = vmatpush.bf16.msra.mxu0 %v463
    %476 = vmatmul.bf16.gmra.mxu0 %v466
    %v477 = vpop.f32.mrf.mxu0
    %v478 = vadd.f32 0.0, %v477
    %v479 = vpop.f32.mrf.mxu0
    %v480 = vadd.f32 0.0, %v479
    %481 = vdwg.mxu0
    %v484 = vunpack.c.l.b16 %v428
    %v485 = vunpack.c.l.b16 %v429
    %v486 = vpack.c.b16 %v485, %v484
    %487 = vrot.lane.b32.xlu0 %v269, 64
    %v488 = vpop.permute.xlu0 %487
    %v491 = vsel %vm335, %v486, 0
    %493 = vmatpush.bf16.msra.mxu0 0
    %494 = vmatpush.bf16.msra.mxu0 0
    %495 = vmatpush.bf16.msra.mxu0 0
    %496 = vmatpush.bf16.msra.mxu0 0
    %497 = vmatpush.bf16.msra.mxu0 0
    %498 = vmatpush.bf16.msra.mxu0 0
    %499 = vmatpush.bf16.msra.mxu0 0
    %500 = vmatpush.bf16.msra.mxu0 %v488
    %501 = vmatmul.bf16.gmra.mxu0 %v491
    %v502 = vpop.f32.mrf.mxu0
    %v503 = vadd.f32 0.0, %v502
    %v504 = vpop.f32.mrf.mxu0
    %v505 = vadd.f32 0.0, %v504
    %506 = vdwg.mxu0
    %v509 = vunpack.c.l.b16 %v430
    %v510 = vunpack.c.l.b16 %v431
    %v511 = vpack.c.b16 %v510, %v509
    %512 = vrot.lane.b32.xlu0 %v296, 64
    %v513 = vpop.permute.xlu0 %512
    %v516 = vsel %vm335, %v511, 0
    %518 = vmatpush.bf16.msra.mxu0 0
    %519 = vmatpush.bf16.msra.mxu0 0
    %520 = vmatpush.bf16.msra.mxu0 0
    %521 = vmatpush.bf16.msra.mxu0 0
    %522 = vmatpush.bf16.msra.mxu0 0
    %523 = vmatpush.bf16.msra.mxu0 0
    %524 = vmatpush.bf16.msra.mxu0 0
    %525 = vmatpush.bf16.msra.mxu0 %v513
    %526 = vmatmul.bf16.gmra.mxu0 %v516
    %v527 = vpop.f32.mrf.mxu0
    %v528 = vadd.f32 0.0, %v527
    %v529 = vpop.f32.mrf.mxu0
    %v530 = vadd.f32 0.0, %v529
    %531 = vdwg.mxu0
    %534 = vrot.lane.b32.xlu0 %v478, 8
    %v535 = vpop.permute.xlu0 %534
    %536 = vrot.lane.b32.xlu0 %v480, 8
    %v537 = vpop.permute.xlu0 %536
    %542 = vrot.lane.b32.xlu0 %v503, 16
    %v543 = vpop.permute.xlu0 %542
    %544 = vrot.lane.b32.xlu0 %v505, 16
    %v545 = vpop.permute.xlu0 %544
    %550 = vrot.lane.b32.xlu0 %v528, 24
    %v551 = vpop.permute.xlu0 %550
    %552 = vrot.lane.b32.xlu0 %v530, 24
    %v553 = vpop.permute.xlu0 %552
    %v556 = vsel %vm217, %v453, %v535
    %v557 = vsel %vm217, %v455, %v537
    %v558 = vsel %vm335, %v556, %v543
    %v559 = vsel %vm335, %v557, %v545
    %vm560 = vcmask 195584
    %v561 = vsel %vm560, %v558, %v551
    %v562 = vsel %vm560, %v559, %v553
    %v563 = vld [vmem:[#allocation8 + $0x10] sm:$0xf]
    %v564 = vld [vmem:[#allocation8 + $0x14] sm:$0xf]
    %v565 = vld [vmem:[#allocation8 + $0x18] sm:$0xf]
    %v566 = vld [vmem:[#allocation8 + $0x1c] sm:$0xf]
    %v567 = vpack.c.bf16 %v562, %v561
    %v568 = vld [vmem:[#allocation7 + $0x3] sm:$0x1]
    %v569 = vperm.slane %v568, 0
    %v574 = vunpack.c.l.b16 %v563
    %v575 = vunpack.c.l.b16 %v564
    %v576 = vunpack.c.l.b16 %v565
    %v577 = vunpack.c.l.b16 %v566
    %v578 = vpack.c.b16 %v575, %v574
    %v579 = vpack.c.b16 %v577, %v576
    %v583 = vsel %vm88, %v567, 0
    %585 = vmatpush.bf16.msra.mxu0 0
    %586 = vmatpush.bf16.msra.mxu0 0
    %587 = vmatpush.bf16.msra.mxu0 0
    %588 = vmatpush.bf16.msra.mxu0 0
    %589 = vmatpush.bf16.msra.mxu0 0
    %590 = vmatpush.bf16.msra.mxu0 0
    %591 = vmatpush.bf16.msra.mxu0 %v579
    %592 = vmatpush.bf16.msra.mxu0 %v578
    %593 = vmatmul.bf16.gmra.mxu0 %v583
    %v594 = vpop.f32.mrf.mxu0
    %v595 = vadd.f32 %v569, %v594
    %v596 = vpop.f32.mrf.mxu0
    %v597 = vadd.f32 %v569, %v596
    %598 = vdwg.mxu0
    %v599 = vadd.f32 %v595, %v144
    %v600 = vadd.f32 %v597, %v145
    %v601 = vld [vmem:[#allocation7 + $0x4] sm:$0x1]
    %v602 = vld [vmem:[#allocation7 + $0x5] sm:$0x1]
    %v603 = vsel %vm88, %v599, 0.0
    %604 = vadd.xlane.f32.xlu0 %v603
    %v605 = vpop.xlane.xlu0 %604
    %v606 = vsel %vm88, %v600, 0.0
    %607 = vadd.xlane.f32.xlu0 %v606
    %v608 = vpop.xlane.xlu0 %607
    %v609 = vmul.f32 %v605, %v101
    %v610 = vmul.f32 %v608, %v101
    %v611 = vsub.f32 %v599, %v609
    %v612 = vsub.f32 %v600, %v610
    %v613 = vmul.f32 %v611, %v611
    %v614 = vmul.f32 %v612, %v612
    %v615 = vsel %vm88, %v613, 0.0
    %616 = vadd.xlane.f32.xlu0 %v615
    %v617 = vpop.xlane.xlu0 %616
    %v618 = vsel %vm88, %v614, 0.0
    %619 = vadd.xlane.f32.xlu0 %v618
    %v620 = vpop.xlane.xlu0 %619
    %v621 = vmul.f32 %v617, %v101
    %v622 = vmul.f32 %v620, %v101
    %v623 = vadd.f32 %v621, 1e-05
    %v624 = vadd.f32 %v622, 1e-05
    %v625 = vrsqrt.pop %v623
    %v626 = vmul.f32 %v625, %v623
    %v627 = vmul.f32 %v626, %v625
    %v628 = vmul.f32 0.5, %v627
    %v629 = vsub.f32 1.5, %v628
    %v630 = vmul.f32 %v625, %v629
    %vm631 = vweird.f32 %v623
    %vm632 = vweird.f32 %v625
    %vm633 = vmor %vm631, %vm632
    %v634 = vsel %vm633, %v625, %v630
    %v635 = vrsqrt.pop %v624
    %v636 = vmul.f32 %v635, %v624
    %v637 = vmul.f32 %v636, %v635
    %v638 = vmul.f32 0.5, %v637
    %v639 = vsub.f32 1.5, %v638
    %v640 = vmul.f32 %v635, %v639
    %vm641 = vweird.f32 %v624
    %vm642 = vweird.f32 %v635
    %vm643 = vmor %vm641, %vm642
    %v644 = vsel %vm643, %v635, %v640
    %v645 = vmul.f32 %v611, %v634
    %v646 = vmul.f32 %v612, %v644
    %v647 = vperm.slane %v601, 0
    %v648 = vmul.f32 %v645, %v647
    %v649 = vmul.f32 %v646, %v647
    %v650 = vperm.slane %v602, 0
    %v651 = vadd.f32 %v648, %v650
    %v652 = vadd.f32 %v649, %v650
    %v653 = vld [vmem:[#allocation8 + $0x20] sm:$0xf]
    %v654 = vld [vmem:[#allocation8 + $0x24] sm:$0xf]
    %v655 = vld [vmem:[#allocation8 + $0x28] sm:$0xf]
    %v656 = vld [vmem:[#allocation8 + $0x2c] sm:$0xf]
    %v657 = vpack.c.bf16 %v652, %v651
    %v658 = vld [vmem:[#allocation7 + $0x6] sm:$0x1]
    %v659 = vperm.slane %v658, 0
    %v664 = vunpack.c.l.b16 %v653
    %v665 = vunpack.c.l.b16 %v654
    %v666 = vunpack.c.l.b16 %v655
    %v667 = vunpack.c.l.b16 %v656
    %v668 = vpack.c.b16 %v665, %v664
    %v669 = vpack.c.b16 %v667, %v666
    %v673 = vsel %vm88, %v657, 0
    %675 = vmatpush.bf16.msra.mxu0 0
    %676 = vmatpush.bf16.msra.mxu0 0
    %677 = vmatpush.bf16.msra.mxu0 0
    %678 = vmatpush.bf16.msra.mxu0 0
    %679 = vmatpush.bf16.msra.mxu0 0
    %680 = vmatpush.bf16.msra.mxu0 0
    %681 = vmatpush.bf16.msra.mxu0 %v669
    %682 = vmatpush.bf16.msra.mxu0 %v668
    %683 = vmatmul.bf16.gmra.mxu0 %v673
    %v684 = vpop.f32.mrf.mxu0
    %v685 = vadd.f32 %v659, %v684
    %v686 = vpop.f32.mrf.mxu0
    %v687 = vadd.f32 %v659, %v686
    %688 = vdwg.mxu0
    %v689 = vmul.f32 %v685, 0.5
    %v690 = vmul.f32 %v687, 0.5
    %v691 = vmul.f32 %v685, 0.044715
    %v692 = vmul.f32 %v687, 0.044715
    %v693 = vmul.f32 %v691, %v685
    %v694 = vmul.f32 %v692, %v687
    %v695 = vmul.f32 %v693, %v685
    %v696 = vmul.f32 %v694, %v687
    %v697 = vadd.f32 %v685, %v695
    %v698 = vadd.f32 %v687, %v696
    %v699 = vmul.f32 %v697, 0.7978846
    %v700 = vmul.f32 %v698, 0.7978846
    %v701 = vtanh.pop %v699
    %v702 = vtanh.pop %v700
    %v703 = vadd.f32 %v701, 1.0
    %v704 = vadd.f32 %v702, 1.0
    %v705 = vmul.f32 %v689, %v703
    %v706 = vmul.f32 %v690, %v704
    %v707 = vld [vmem:[#allocation8 + $0x30] sm:$0xf]
    %v708 = vld [vmem:[#allocation8 + $0x34] sm:$0xf]
    %v709 = vld [vmem:[#allocation8 + $0x38] sm:$0xf]
    %v710 = vld [vmem:[#allocation8 + $0x3c] sm:$0xf]
    %v711 = vld [vmem:[#allocation8 + $0x40] sm:$0xf]
    %v712 = vld [vmem:[#allocation8 + $0x44] sm:$0xf]
    %v713 = vld [vmem:[#allocation8 + $0x48] sm:$0xf]
    %v714 = vld [vmem:[#allocation8 + $0x4c] sm:$0xf]
    %v715 = vpack.c.bf16 %v706, %v705
    %v716 = vld [vmem:[#allocation7 + $0x7] sm:$0x1]
    %v717 = vperm.slane %v716, 0
    %v726 = vunpack.c.l.b16 %v707
    %v727 = vunpack.c.l.b16 %v708
    %v728 = vunpack.c.l.b16 %v709
    %v729 = vunpack.c.l.b16 %v710
    %v730 = vunpack.c.l.b16 %v711
    %v731 = vunpack.c.l.b16 %v712
    %v732 = vunpack.c.l.b16 %v713
    %v733 = vunpack.c.l.b16 %v714
    %v734 = vpack.c.b16 %v727, %v726
    %v735 = vpack.c.b16 %v729, %v728
    %v736 = vpack.c.b16 %v731, %v730
    %v737 = vpack.c.b16 %v733, %v732
    %vm742 = vcmask 523264
    %v744 = vsel %vm742, %v715, 0
    %746 = vmatpush.bf16.msra.mxu0 0
    %747 = vmatpush.bf16.msra.mxu0 0
    %748 = vmatpush.bf16.msra.mxu0 0
    %749 = vmatpush.bf16.msra.mxu0 0
    %750 = vmatpush.bf16.msra.mxu0 %v737
    %751 = vmatpush.bf16.msra.mxu0 %v736
    %752 = vmatpush.bf16.msra.mxu0 %v735
    %753 = vmatpush.bf16.msra.mxu0 %v734
    %754 = vmatmul.bf16.gmra.mxu0 %v744
    %v755 = vpop.f32.mrf.mxu0
    %v756 = vadd.f32 %v717, %v755
    %v757 = vpop.f32.mrf.mxu0
    %v758 = vadd.f32 %v717, %v757
    %759 = vdwg.mxu0
    %v760 = vadd.f32 %v756, %v651
    %v761 = vadd.f32 %v758, %v652
    %v762 = vld [vmem:[#allocation7 + $0x8] sm:$0x1]
    %v763 = vld [vmem:[#allocation7 + $0x9] sm:$0x1]
    %v764 = vsel %vm88, %v760, 0.0
    %765 = vadd.xlane.f32.xlu0 %v764
    %v766 = vpop.xlane.xlu0 %765
    %v767 = vsel %vm88, %v761, 0.0
    %768 = vadd.xlane.f32.xlu0 %v767
    %v769 = vpop.xlane.xlu0 %768
    %v770 = vmul.f32 %v766, %v101
    %v771 = vmul.f32 %v769, %v101
    %v772 = vsub.f32 %v760, %v770
    %v773 = vsub.f32 %v761, %v771
    %v774 = vmul.f32 %v772, %v772
    %v775 = vmul.f32 %v773, %v773
    %v776 = vsel %vm88, %v774, 0.0
    %777 = vadd.xlane.f32.xlu0 %v776
    %v778 = vpop.xlane.xlu0 %777
    %v779 = vsel %vm88, %v775, 0.0
    %780 = vadd.xlane.f32.xlu0 %v779
    %v781 = vpop.xlane.xlu0 %780
    %v782 = vmul.f32 %v778, %v101
    %v783 = vmul.f32 %v781, %v101
    %v784 = vadd.f32 %v782, 1e-05
    %v785 = vadd.f32 %v783, 1e-05
    %v786 = vrsqrt.pop %v784
    %v787 = vmul.f32 %v786, %v784
    %v788 = vmul.f32 %v787, %v786
    %v789 = vmul.f32 0.5, %v788
    %v790 = vsub.f32 1.5, %v789
    %v791 = vmul.f32 %v786, %v790
    %vm792 = vweird.f32 %v784
    %vm793 = vweird.f32 %v786
    %vm794 = vmor %vm792, %vm793
    %v795 = vsel %vm794, %v786, %v791
    %v796 = vrsqrt.pop %v785
    %v797 = vmul.f32 %v796, %v785
    %v798 = vmul.f32 %v797, %v796
    %v799 = vmul.f32 0.5, %v798
    %v800 = vsub.f32 1.5, %v799
    %v801 = vmul.f32 %v796, %v800
    %vm802 = vweird.f32 %v785
    %vm803 = vweird.f32 %v796
    %vm804 = vmor %vm802, %vm803
    %v805 = vsel %vm804, %v796, %v801
    %v806 = vmul.f32 %v772, %v795
    %v807 = vmul.f32 %v773, %v805
    %v808 = vperm.slane %v762, 0
    %v809 = vmul.f32 %v806, %v808
    %v810 = vmul.f32 %v807, %v808
    %v811 = vperm.slane %v763, 0
    %v812 = vadd.f32 %v809, %v811
    %v813 = vadd.f32 %v810, %v811
    %v814 = vld [vmem:[#allocation8 + $0x50] sm:$0xf]
    %v815 = vld [vmem:[#allocation8 + $0x54] sm:$0xf]
    %v816 = vld [vmem:[#allocation8 + $0x58] sm:$0xf]
    %v817 = vld [vmem:[#allocation8 + $0x5c] sm:$0xf]
    %v818 = vpack.c.bf16 %v813, %v812
    %v819 = vld [vmem:[#allocation7 + $0xa] sm:$0x1]
    %v820 = vperm.slane %v819, 0
    %v825 = vunpack.c.l.b16 %v814
    %v826 = vunpack.c.l.b16 %v815
    %v827 = vunpack.c.l.b16 %v816
    %v828 = vunpack.c.l.b16 %v817
    %v829 = vpack.c.b16 %v826, %v825
    %v830 = vpack.c.b16 %v828, %v827
    %v834 = vsel %vm88, %v818, 0
    %836 = vmatpush.bf16.msra.mxu0 0
    %837 = vmatpush.bf16.msra.mxu0 0
    %838 = vmatpush.bf16.msra.mxu0 0
    %839 = vmatpush.bf16.msra.mxu0 0
    %840 = vmatpush.bf16.msra.mxu0 0
    %841 = vmatpush.bf16.msra.mxu0 0
    %842 = vmatpush.bf16.msra.mxu0 %v830
    %843 = vmatpush.bf16.msra.mxu0 %v829
    %844 = vmatmul.bf16.gmra.mxu0 %v834
    %v845 = vpop.f32.mrf.mxu0
    %v846 = vadd.f32 %v820, %v845
    %v847 = vpop.f32.mrf.mxu0
    %v848 = vadd.f32 %v820, %v847
    %849 = vdwg.mxu0
    %852 = vrot.lane.b32.xlu0 %v846, 120
    %v853 = vpop.permute.xlu0 %852
    %854 = vrot.lane.b32.xlu0 %v848, 120
    %v855 = vpop.permute.xlu0 %854
    %858 = vrot.lane.b32.xlu0 %v846, 112
    %v859 = vpop.permute.xlu0 %858
    %860 = vrot.lane.b32.xlu0 %v848, 112
    %v861 = vpop.permute.xlu0 %860
    %864 = vrot.lane.b32.xlu0 %v846, 104
    %v865 = vpop.permute.xlu0 %864
    %866 = vrot.lane.b32.xlu0 %v848, 104
    %v867 = vpop.permute.xlu0 %866
    %v870 = vpack.c.bf16 %v846, %v846
    %v871 = vpack.c.bf16 %v848, %v848
    %v872 = vpack.c.bf16 %v853, %v853
    %v873 = vpack.c.bf16 %v855, %v855
    %v874 = vpack.c.bf16 %v859, %v859
    %v875 = vpack.c.bf16 %v861, %v861
    %v876 = vpack.c.bf16 %v865, %v865
    %v877 = vpack.c.bf16 %v867, %v867
    %v880 = vunpack.c.l.b16 %v870
    %v881 = vunpack.c.l.b16 %v871
    %v882 = vpack.c.b16 %v881, %v880
    %883 = vrot.lane.b32.xlu0 %v882, 96
    %v884 = vpop.permute.xlu0 %883
    %v886 = vsel %vm217, %v882, 0
    %v889 = vsel %vm217, %v884, 0
    %891 = vmatpush.bf16.xpose.msra.mxu0 0
    %892 = vmatpush.bf16.xpose.msra.mxu0 0
    %893 = vmatpush.bf16.xpose.msra.mxu0 0
    %894 = vmatpush.bf16.xpose.msra.mxu0 0
    %895 = vmatpush.bf16.xpose.msra.mxu0 0
    %896 = vmatpush.bf16.xpose.msra.mxu0 0
    %897 = vmatpush.bf16.xpose.msra.mxu0 0
    %898 = vmatpush.bf16.xpose.msra.mxu0 %v889
    %899 = vmatmul.bf16.gmra.mxu0 %v886
    %v900 = vpop.f32.mrf.mxu0
    %v901 = vadd.f32 0.0, %v900
    %v902 = vpop.f32.mrf.mxu0
    %v903 = vadd.f32 0.0, %v902
    %904 = vdwg.mxu0
    %v907 = vunpack.c.l.b16 %v872
    %v908 = vunpack.c.l.b16 %v873
    %v909 = vpack.c.b16 %v908, %v907
    %910 = vrot.lane.b32.xlu0 %v909, 96
    %v911 = vpop.permute.xlu0 %910
    %v913 = vsel %vm217, %v909, 0
    %v916 = vsel %vm217, %v911, 0
    %918 = vmatpush.bf16.xpose.msra.mxu0 0
    %919 = vmatpush.bf16.xpose.msra.mxu0 0
    %920 = vmatpush.bf16.xpose.msra.mxu0 0
    %921 = vmatpush.bf16.xpose.msra.mxu0 0
    %922 = vmatpush.bf16.xpose.msra.mxu0 0
    %923 = vmatpush.bf16.xpose.msra.mxu0 0
    %924 = vmatpush.bf16.xpose.msra.mxu0 0
    %925 = vmatpush.bf16.xpose.msra.mxu0 %v916
    %926 = vmatmul.bf16.gmra.mxu0 %v913
    %v927 = vpop.f32.mrf.mxu0
    %v928 = vadd.f32 0.0, %v927
    %v929 = vpop.f32.mrf.mxu0
    %v930 = vadd.f32 0.0, %v929
    %931 = vdwg.mxu0
    %v934 = vunpack.c.l.b16 %v874
    %v935 = vunpack.c.l.b16 %v875
    %v936 = vpack.c.b16 %v935, %v934
    %937 = vrot.lane.b32.xlu0 %v936, 96
    %v938 = vpop.permute.xlu0 %937
    %v940 = vsel %vm217, %v936, 0
    %v943 = vsel %vm217, %v938, 0
    %945 = vmatpush.bf16.xpose.msra.mxu0 0
    %946 = vmatpush.bf16.xpose.msra.mxu0 0
    %947 = vmatpush.bf16.xpose.msra.mxu0 0
    %948 = vmatpush.bf16.xpose.msra.mxu0 0
    %949 = vmatpush.bf16.xpose.msra.mxu0 0
    %950 = vmatpush.bf16.xpose.msra.mxu0 0
    %951 = vmatpush.bf16.xpose.msra.mxu0 0
    %952 = vmatpush.bf16.xpose.msra.mxu0 %v943
    %953 = vmatmul.bf16.gmra.mxu0 %v940
    %v954 = vpop.f32.mrf.mxu0
    %v955 = vadd.f32 0.0, %v954
    %v956 = vpop.f32.mrf.mxu0
    %v957 = vadd.f32 0.0, %v956
    %958 = vdwg.mxu0
    %v961 = vunpack.c.l.b16 %v876
    %v962 = vunpack.c.l.b16 %v877
    %v963 = vpack.c.b16 %v962, %v961
    %964 = vrot.lane.b32.xlu0 %v963, 96
    %v965 = vpop.permute.xlu0 %964
    %v967 = vsel %vm217, %v963, 0
    %v970 = vsel %vm217, %v965, 0
    %972 = vmatpush.bf16.xpose.msra.mxu0 0
    %973 = vmatpush.bf16.xpose.msra.mxu0 0
    %974 = vmatpush.bf16.xpose.msra.mxu0 0
    %975 = vmatpush.bf16.xpose.msra.mxu0 0
    %976 = vmatpush.bf16.xpose.msra.mxu0 0
    %977 = vmatpush.bf16.xpose.msra.mxu0 0
    %978 = vmatpush.bf16.xpose.msra.mxu0 0
    %979 = vmatpush.bf16.xpose.msra.mxu0 %v970
    %980 = vmatmul.bf16.gmra.mxu0 %v967
    %v981 = vpop.f32.mrf.mxu0
    %v982 = vadd.f32 0.0, %v981
    %v983 = vpop.f32.mrf.mxu0
    %v984 = vadd.f32 0.0, %v983
    %985 = vdwg.mxu0
    %v986 = vmul.f32 %v901, 0.35355338
    %v987 = vmul.f32 %v903, 0.35355338
    %v988 = vmul.f32 %v928, 0.35355338
    %v989 = vmul.f32 %v930, 0.35355338
    %v990 = vmul.f32 %v955, 0.35355338
    %v991 = vmul.f32 %v957, 0.35355338
    %v992 = vmul.f32 %v982, 0.35355338
    %v993 = vmul.f32 %v984, 0.35355338
    %v994 = vadd.f32 %v986, %v82
    %v995 = vadd.f32 %v987, %v83
    %v996 = vadd.f32 %v988, %v82
    %v997 = vadd.f32 %v989, %v83
    %v998 = vadd.f32 %v990, %v82
    %v999 = vadd.f32 %v991, %v83
    %v1000 = vadd.f32 %v992, %v82
    %v1001 = vadd.f32 %v993, %v83
    %v1002 = vsel %vm335, %v994, -inf
    %1003 = vmax.xlane.f32.xlu0 %v1002
    %v1004 = vpop.xlane.xlu0 %1003
    %v1005 = vsel %vm335, %v995, -inf
    %1006 = vmax.xlane.f32.xlu0 %v1005
    %v1007 = vpop.xlane.xlu0 %1006
    %v1008 = vsel %vm335, %v996, -inf
    %1009 = vmax.xlane.f32.xlu0 %v1008
    %v1010 = vpop.xlane.xlu0 %1009
    %v1011 = vsel %vm335, %v997, -inf
    %1012 = vmax.xlane.f32.xlu0 %v1011
    %v1013 = vpop.xlane.xlu0 %1012
    %v1014 = vsel %vm335, %v998, -inf
    %1015 = vmax.xlane.f32.xlu0 %v1014
    %v1016 = vpop.xlane.xlu0 %1015
    %v1017 = vsel %vm335, %v999, -inf
    %1018 = vmax.xlane.f32.xlu0 %v1017
    %v1019 = vpop.xlane.xlu0 %1018
    %v1020 = vsel %vm335, %v1000, -inf
    %1021 = vmax.xlane.f32.xlu0 %v1020
    %v1022 = vpop.xlane.xlu0 %1021
    %v1023 = vsel %vm335, %v1001, -inf
    %1024 = vmax.xlane.f32.xlu0 %v1023
    %v1025 = vpop.xlane.xlu0 %1024
    %v1026 = vsub.f32 %v994, %v1004
    %v1027 = vsub.f32 %v995, %v1007
    %v1028 = vsub.f32 %v996, %v1010
    %v1029 = vsub.f32 %v997, %v1013
    %v1030 = vsub.f32 %v998, %v1016
    %v1031 = vsub.f32 %v999, %v1019
    %v1032 = vsub.f32 %v1000, %v1022
    %v1033 = vsub.f32 %v1001, %v1025
    %v1034 = vmul.f32 %v1026, 1.442695
    %v1035 = vpow.pop %v1034
    %v1036 = vmul.f32 %v1027, 1.442695
    %v1037 = vpow.pop %v1036
    %v1038 = vmul.f32 %v1028, 1.442695
    %v1039 = vpow.pop %v1038
    %v1040 = vmul.f32 %v1029, 1.442695
    %v1041 = vpow.pop %v1040
    %v1042 = vmul.f32 %v1030, 1.442695
    %v1043 = vpow.pop %v1042
    %v1044 = vmul.f32 %v1031, 1.442695
    %v1045 = vpow.pop %v1044
    %v1046 = vmul.f32 %v1032, 1.442695
    %v1047 = vpow.pop %v1046
    %v1048 = vmul.f32 %v1033, 1.442695
    %v1049 = vpow.pop %v1048
    %v1050 = vsel %vm335, %v1035, 0.0
    %1051 = vadd.xlane.f32.xlu0 %v1050
    %v1052 = vpop.xlane.xlu0 %1051
    %v1053 = vsel %vm335, %v1037, 0.0
    %1054 = vadd.xlane.f32.xlu0 %v1053
    %v1055 = vpop.xlane.xlu0 %1054
    %v1056 = vsel %vm335, %v1039, 0.0
    %1057 = vadd.xlane.f32.xlu0 %v1056
    %v1058 = vpop.xlane.xlu0 %1057
    %v1059 = vsel %vm335, %v1041, 0.0
    %1060 = vadd.xlane.f32.xlu0 %v1059
    %v1061 = vpop.xlane.xlu0 %1060
    %v1062 = vsel %vm335, %v1043, 0.0
    %1063 = vadd.xlane.f32.xlu0 %v1062
    %v1064 = vpop.xlane.xlu0 %1063
    %v1065 = vsel %vm335, %v1045, 0.0
    %1066 = vadd.xlane.f32.xlu0 %v1065
    %v1067 = vpop.xlane.xlu0 %1066
    %v1068 = vsel %vm335, %v1047, 0.0
    %1069 = vadd.xlane.f32.xlu0 %v1068
    %v1070 = vpop.xlane.xlu0 %1069
    %v1071 = vsel %vm335, %v1049, 0.0
    %1072 = vadd.xlane.f32.xlu0 %v1071
    %v1073 = vpop.xlane.xlu0 %1072
    %v1074 = vrcp.pop %v1052
    %v1075 = vrcp.pop %v1055
    %v1076 = vrcp.pop %v1058
    %v1077 = vrcp.pop %v1061
    %v1078 = vrcp.pop %v1064
    %v1079 = vrcp.pop %v1067
    %v1080 = vrcp.pop %v1070
    %v1081 = vrcp.pop %v1073
    %v1082 = vmul.f32 %v1035, %v1074
    %v1083 = vmul.f32 %v1037, %v1075
    %v1084 = vmul.f32 %v1039, %v1076
    %v1085 = vmul.f32 %v1041, %v1077
    %v1086 = vmul.f32 %v1043, %v1078
    %v1087 = vmul.f32 %v1045, %v1079
    %v1088 = vmul.f32 %v1047, %v1080
    %v1089 = vmul.f32 %v1049, %v1081
    %v1090 = vpack.c.bf16 %v1082, %v1082
    %v1091 = vpack.c.bf16 %v1083, %v1083
    %v1092 = vpack.c.bf16 %v1084, %v1084
    %v1093 = vpack.c.bf16 %v1085, %v1085
    %v1094 = vpack.c.bf16 %v1086, %v1086
    %v1095 = vpack.c.bf16 %v1087, %v1087
    %v1096 = vpack.c.bf16 %v1088, %v1088
    %v1097 = vpack.c.bf16 %v1089, %v1089
    %v1100 = vunpack.c.l.b16 %v1090
    %v1101 = vunpack.c.l.b16 %v1091
    %v1102 = vpack.c.b16 %v1101, %v1100
    %1103 = vrot.lane.b32.xlu0 %v882, 64
    %v1104 = vpop.permute.xlu0 %1103
    %v1107 = vsel %vm335, %v1102, 0
    %1109 = vmatpush.bf16.msra.mxu0 0
    %1110 = vmatpush.bf16.msra.mxu0 0
    %1111 = vmatpush.bf16.msra.mxu0 0
    %1112 = vmatpush.bf16.msra.mxu0 0
    %1113 = vmatpush.bf16.msra.mxu0 0
    %1114 = vmatpush.bf16.msra.mxu0 0
    %1115 = vmatpush.bf16.msra.mxu0 0
    %1116 = vmatpush.bf16.msra.mxu0 %v1104
    %1117 = vmatmul.bf16.gmra.mxu0 %v1107
    %v1118 = vpop.f32.mrf.mxu0
    %v1119 = vadd.f32 0.0, %v1118
    %v1120 = vpop.f32.mrf.mxu0
    %v1121 = vadd.f32 0.0, %v1120
    %1122 = vdwg.mxu0
    %v1125 = vunpack.c.l.b16 %v1092
    %v1126 = vunpack.c.l.b16 %v1093
    %v1127 = vpack.c.b16 %v1126, %v1125
    %1128 = vrot.lane.b32.xlu0 %v909, 64
    %v1129 = vpop.permute.xlu0 %1128
    %v1132 = vsel %vm335, %v1127, 0
    %1134 = vmatpush.bf16.msra.mxu0 0
    %1135 = vmatpush.bf16.msra.mxu0 0
    %1136 = vmatpush.bf16.msra.mxu0 0
    %1137 = vmatpush.bf16.msra.mxu0 0
    %1138 = vmatpush.bf16.msra.mxu0 0
    %1139 = vmatpush.bf16.msra.mxu0 0
    %1140 = vmatpush.bf16.msra.mxu0 0
    %1141 = vmatpush.bf16.msra.mxu0 %v1129
    %1142 = vmatmul.bf16.gmra.mxu0 %v1132
    %v1143 = vpop.f32.mrf.mxu0
    %v1144 = vadd.f32 0.0, %v1143
    %v1145 = vpop.f32.mrf.mxu0
    %v1146 = vadd.f32 0.0, %v1145
    %1147 = vdwg.mxu0
    %v1150 = vunpack.c.l.b16 %v1094
    %v1151 = vunpack.c.l.b16 %v1095
    %v1152 = vpack.c.b16 %v1151, %v1150
    %1153 = vrot.lane.b32.xlu0 %v936, 64
    %v1154 = vpop.permute.xlu0 %1153
    %v1157 = vsel %vm335, %v1152, 0
    %1159 = vmatpush.bf16.msra.mxu0 0
    %1160 = vmatpush.bf16.msra.mxu0 0
    %1161 = vmatpush.bf16.msra.mxu0 0
    %1162 = vmatpush.bf16.msra.mxu0 0
    %1163 = vmatpush.bf16.msra.mxu0 0
    %1164 = vmatpush.bf16.msra.mxu0 0
    %1165 = vmatpush.bf16.msra.mxu0 0
    %1166 = vmatpush.bf16.msra.mxu0 %v1154
    %1167 = vmatmul.bf16.gmra.mxu0 %v1157
    %v1168 = vpop.f32.mrf.mxu0
    %v1169 = vadd.f32 0.0, %v1168
    %v1170 = vpop.f32.mrf.mxu0
    %v1171 = vadd.f32 0.0, %v1170
    %1172 = vdwg.mxu0
    %v1175 = vunpack.c.l.b16 %v1096
    %v1176 = vunpack.c.l.b16 %v1097
    %v1177 = vpack.c.b16 %v1176, %v1175
    %1178 = vrot.lane.b32.xlu0 %v963, 64
    %v1179 = vpop.permute.xlu0 %1178
    %v1182 = vsel %vm335, %v1177, 0
    %1184 = vmatpush.bf16.msra.mxu0 0
    %1185 = vmatpush.bf16.msra.mxu0 0
    %1186 = vmatpush.bf16.msra.mxu0 0
    %1187 = vmatpush.bf16.msra.mxu0 0
    %1188 = vmatpush.bf16.msra.mxu0 0
    %1189 = vmatpush.bf16.msra.mxu0 0
    %1190 = vmatpush.bf16.msra.mxu0 0
    %1191 = vmatpush.bf16.msra.mxu0 %v1179
    %1192 = vmatmul.bf16.gmra.mxu0 %v1182
    %v1193 = vpop.f32.mrf.mxu0
    %v1194 = vadd.f32 0.0, %v1193
    %v1195 = vpop.f32.mrf.mxu0
    %v1196 = vadd.f32 0.0, %v1195
    %1197 = vdwg.mxu0
    %1200 = vrot.lane.b32.xlu0 %v1144, 8
    %v1201 = vpop.permute.xlu0 %1200
    %1202 = vrot.lane.b32.xlu0 %v1146, 8
    %v1203 = vpop.permute.xlu0 %1202
    %1208 = vrot.lane.b32.xlu0 %v1169, 16
    %v1209 = vpop.permute.xlu0 %1208
    %1210 = vrot.lane.b32.xlu0 %v1171, 16
    %v1211 = vpop.permute.xlu0 %1210
    %1216 = vrot.lane.b32.xlu0 %v1194, 24
    %v1217 = vpop.permute.xlu0 %1216
    %1218 = vrot.lane.b32.xlu0 %v1196, 24
    %v1219 = vpop.permute.xlu0 %1218
    %v1222 = vsel %vm217, %v1119, %v1201
    %v1223 = vsel %vm217, %v1121, %v1203
    %v1224 = vsel %vm335, %v1222, %v1209
    %v1225 = vsel %vm335, %v1223, %v1211
    %v1226 = vsel %vm560, %v1224, %v1217
    %v1227 = vsel %vm560, %v1225, %v1219
    %v1228 = vld [vmem:[#allocation8 + $0x60] sm:$0xf]
    %v1229 = vld [vmem:[#allocation8 + $0x64] sm:$0xf]
    %v1230 = vld [vmem:[#allocation8 + $0x68] sm:$0xf]
    %v1231 = vld [vmem:[#allocation8 + $0x6c] sm:$0xf]
    %v1232 = vpack.c.bf16 %v1227, %v1226
    %v1233 = vld [vmem:[#allocation7 + $0xb] sm:$0x1]
    %v1234 = vperm.slane %v1233, 0
    %v1239 = vunpack.c.l.b16 %v1228
    %v1240 = vunpack.c.l.b16 %v1229
    %v1241 = vunpack.c.l.b16 %v1230
    %v1242 = vunpack.c.l.b16 %v1231
    %v1243 = vpack.c.b16 %v1240, %v1239
    %v1244 = vpack.c.b16 %v1242, %v1241
    %v1248 = vsel %vm88, %v1232, 0
    %1250 = vmatpush.bf16.msra.mxu0 0
    %1251 = vmatpush.bf16.msra.mxu0 0
    %1252 = vmatpush.bf16.msra.mxu0 0
    %1253 = vmatpush.bf16.msra.mxu0 0
    %1254 = vmatpush.bf16.msra.mxu0 0
    %1255 = vmatpush.bf16.msra.mxu0 0
    %1256 = vmatpush.bf16.msra.mxu0 %v1244
    %1257 = vmatpush.bf16.msra.mxu0 %v1243
    %1258 = vmatmul.bf16.gmra.mxu0 %v1248
    %v1259 = vpop.f32.mrf.mxu0
    %v1260 = vadd.f32 %v1234, %v1259
    %v1261 = vpop.f32.mrf.mxu0
    %v1262 = vadd.f32 %v1234, %v1261
    %1263 = vdwg.mxu0
    %v1264 = vadd.f32 %v1260, %v812
    %v1265 = vadd.f32 %v1262, %v813
    %v1266 = vld [vmem:[#allocation7 + $0xc] sm:$0x1]
    %v1267 = vld [vmem:[#allocation7 + $0xd] sm:$0x1]
    %v1268 = vsel %vm88, %v1264, 0.0
    %1269 = vadd.xlane.f32.xlu0 %v1268
    %v1270 = vpop.xlane.xlu0 %1269
    %v1271 = vsel %vm88, %v1265, 0.0
    %1272 = vadd.xlane.f32.xlu0 %v1271
    %v1273 = vpop.xlane.xlu0 %1272
    %v1274 = vmul.f32 %v1270, %v101
    %v1275 = vmul.f32 %v1273, %v101
    %v1276 = vsub.f32 %v1264, %v1274
    %v1277 = vsub.f32 %v1265, %v1275
    %v1278 = vmul.f32 %v1276, %v1276
    %v1279 = vmul.f32 %v1277, %v1277
    %v1280 = vsel %vm88, %v1278, 0.0
    %1281 = vadd.xlane.f32.xlu0 %v1280
    %v1282 = vpop.xlane.xlu0 %1281
    %v1283 = vsel %vm88, %v1279, 0.0
    %1284 = vadd.xlane.f32.xlu0 %v1283
    %v1285 = vpop.xlane.xlu0 %1284
    %v1286 = vmul.f32 %v1282, %v101
    %v1287 = vmul.f32 %v1285, %v101
    %v1288 = vadd.f32 %v1286, 1e-05
    %v1289 = vadd.f32 %v1287, 1e-05
    %v1290 = vrsqrt.pop %v1288
    %v1291 = vmul.f32 %v1290, %v1288
    %v1292 = vmul.f32 %v1291, %v1290
    %v1293 = vmul.f32 0.5, %v1292
    %v1294 = vsub.f32 1.5, %v1293
    %v1295 = vmul.f32 %v1290, %v1294
    %vm1296 = vweird.f32 %v1288
    %vm1297 = vweird.f32 %v1290
    %vm1298 = vmor %vm1296, %vm1297
    %v1299 = vsel %vm1298, %v1290, %v1295
    %v1300 = vrsqrt.pop %v1289
    %v1301 = vmul.f32 %v1300, %v1289
    %v1302 = vmul.f32 %v1301, %v1300
    %v1303 = vmul.f32 0.5, %v1302
    %v1304 = vsub.f32 1.5, %v1303
    %v1305 = vmul.f32 %v1300, %v1304
    %vm1306 = vweird.f32 %v1289
    %vm1307 = vweird.f32 %v1300
    %vm1308 = vmor %vm1306, %vm1307
    %v1309 = vsel %vm1308, %v1300, %v1305
    %v1310 = vmul.f32 %v1276, %v1299
    %v1311 = vmul.f32 %v1277, %v1309
    %v1312 = vperm.slane %v1266, 0
    %v1313 = vmul.f32 %v1310, %v1312
    %v1314 = vmul.f32 %v1311, %v1312
    %v1315 = vperm.slane %v1267, 0
    %v1316 = vadd.f32 %v1313, %v1315
    %v1317 = vadd.f32 %v1314, %v1315
    %v1318 = vld [vmem:[#allocation8 + $0x70] sm:$0xf]
    %v1319 = vld [vmem:[#allocation8 + $0x74] sm:$0xf]
    %v1320 = vld [vmem:[#allocation8 + $0x78] sm:$0xf]
    %v1321 = vld [vmem:[#allocation8 + $0x7c] sm:$0xf]
    %v1322 = vpack.c.bf16 %v1317, %v1316
    %v1323 = vld [vmem:[#allocation7 + $0xe] sm:$0x1]
    %v1324 = vperm.slane %v1323, 0
    %v1329 = vunpack.c.l.b16 %v1318
    %v1330 = vunpack.c.l.b16 %v1319
    %v1331 = vunpack.c.l.b16 %v1320
    %v1332 = vunpack.c.l.b16 %v1321
    %v1333 = vpack.c.b16 %v1330, %v1329
    %v1334 = vpack.c.b16 %v1332, %v1331
    %v1338 = vsel %vm88, %v1322, 0
    %1340 = vmatpush.bf16.msra.mxu0 0
    %1341 = vmatpush.bf16.msra.mxu0 0
    %1342 = vmatpush.bf16.msra.mxu0 0
    %1343 = vmatpush.bf16.msra.mxu0 0
    %1344 = vmatpush.bf16.msra.mxu0 0
    %1345 = vmatpush.bf16.msra.mxu0 0
    %1346 = vmatpush.bf16.msra.mxu0 %v1334
    %1347 = vmatpush.bf16.msra.mxu0 %v1333
    %1348 = vmatmul.bf16.gmra.mxu0 %v1338
    %v1349 = vpop.f32.mrf.mxu0
    %v1350 = vadd.f32 %v1324, %v1349
    %v1351 = vpop.f32.mrf.mxu0
    %v1352 = vadd.f32 %v1324, %v1351
    %1353 = vdwg.mxu0
    %v1354 = vmul.f32 %v1350, 0.5
    %v1355 = vmul.f32 %v1352, 0.5
    %v1356 = vmul.f32 %v1350, 0.044715
    %v1357 = vmul.f32 %v1352, 0.044715
    %v1358 = vmul.f32 %v1356, %v1350
    %v1359 = vmul.f32 %v1357, %v1352
    %v1360 = vmul.f32 %v1358, %v1350
    %v1361 = vmul.f32 %v1359, %v1352
    %v1362 = vadd.f32 %v1350, %v1360
    %v1363 = vadd.f32 %v1352, %v1361
    %v1364 = vmul.f32 %v1362, 0.7978846
    %v1365 = vmul.f32 %v1363, 0.7978846
    %v1366 = vtanh.pop %v1364
    %v1367 = vtanh.pop %v1365
    %v1368 = vadd.f32 %v1366, 1.0
    %v1369 = vadd.f32 %v1367, 1.0
    %v1370 = vmul.f32 %v1354, %v1368
    %v1371 = vmul.f32 %v1355, %v1369
    %v1372 = vld [vmem:[#allocation8 + $0x80] sm:$0xf]
    %v1373 = vld [vmem:[#allocation8 + $0x84] sm:$0xf]
    %v1374 = vld [vmem:[#allocation8 + $0x88] sm:$0xf]
    %v1375 = vld [vmem:[#allocation8 + $0x8c] sm:$0xf]
    %v1376 = vld [vmem:[#allocation8 + $0x90] sm:$0xf]
    %v1377 = vld [vmem:[#allocation8 + $0x94] sm:$0xf]
    %v1378 = vld [vmem:[#allocation8 + $0x98] sm:$0xf]
    %v1379 = vld [vmem:[#allocation8 + $0x9c] sm:$0xf]
    %v1380 = vpack.c.bf16 %v1371, %v1370
    %v1381 = vld [vmem:[#allocation7 + $0xf] sm:$0x1]
    %v1382 = vperm.slane %v1381, 0
    %v1391 = vunpack.c.l.b16 %v1372
    %v1392 = vunpack.c.l.b16 %v1373
    %v1393 = vunpack.c.l.b16 %v1374
    %v1394 = vunpack.c.l.b16 %v1375
    %v1395 = vunpack.c.l.b16 %v1376
    %v1396 = vunpack.c.l.b16 %v1377
    %v1397 = vunpack.c.l.b16 %v1378
    %v1398 = vunpack.c.l.b16 %v1379
    %v1399 = vpack.c.b16 %v1392, %v1391
    %v1400 = vpack.c.b16 %v1394, %v1393
    %v1401 = vpack.c.b16 %v1396, %v1395
    %v1402 = vpack.c.b16 %v1398, %v1397
    %v1408 = vsel %vm742, %v1380, 0
    %1410 = vmatpush.bf16.msra.mxu0 0
    %1411 = vmatpush.bf16.msra.mxu0 0
    %1412 = vmatpush.bf16.msra.mxu0 0
    %1413 = vmatpush.bf16.msra.mxu0 0
    %1414 = vmatpush.bf16.msra.mxu0 %v1402
    %1415 = vmatpush.bf16.msra.mxu0 %v1401
    %1416 = vmatpush.bf16.msra.mxu0 %v1400
    %1417 = vmatpush.bf16.msra.mxu0 %v1399
    %1418 = vmatmul.bf16.gmra.mxu0 %v1408
    %v1419 = vpop.f32.mrf.mxu0
    %v1420 = vadd.f32 %v1382, %v1419
    %v1421 = vpop.f32.mrf.mxu0
    %v1422 = vadd.f32 %v1382, %v1421
    %1423 = vdwg.mxu0
    %v1424 = vadd.f32 %v1420, %v1316
    %v1425 = vadd.f32 %v1422, %v1317
    %v1426 = vld [vmem:[#allocation7 + $0x10] sm:$0x1]
    %v1427 = vld [vmem:[#allocation7 + $0x11] sm:$0x1]
    %v1428 = vsel %vm88, %v1424, 0.0
    %1429 = vadd.xlane.f32.xlu0 %v1428
    %v1430 = vpop.xlane.xlu0 %1429
    %v1431 = vsel %vm88, %v1425, 0.0
    %1432 = vadd.xlane.f32.xlu0 %v1431
    %v1433 = vpop.xlane.xlu0 %1432
    %v1434 = vmul.f32 %v1430, %v101
    %v1435 = vmul.f32 %v1433, %v101
    %v1436 = vsub.f32 %v1424, %v1434
    %v1437 = vsub.f32 %v1425, %v1435
    %v1438 = vmul.f32 %v1436, %v1436
    %v1439 = vmul.f32 %v1437, %v1437
    %v1440 = vsel %vm88, %v1438, 0.0
    %1441 = vadd.xlane.f32.xlu0 %v1440
    %v1442 = vpop.xlane.xlu0 %1441
    %v1443 = vsel %vm88, %v1439, 0.0
    %1444 = vadd.xlane.f32.xlu0 %v1443
    %v1445 = vpop.xlane.xlu0 %1444
    %v1446 = vmul.f32 %v1442, %v101
    %v1447 = vmul.f32 %v1445, %v101
    %v1448 = vadd.f32 %v1446, 1e-05
    %v1449 = vadd.f32 %v1447, 1e-05
    %v1450 = vrsqrt.pop %v1448
    %v1451 = vmul.f32 %v1450, %v1448
    %v1452 = vmul.f32 %v1451, %v1450
    %v1453 = vmul.f32 0.5, %v1452
    %v1454 = vsub.f32 1.5, %v1453
    %v1455 = vmul.f32 %v1450, %v1454
    %vm1456 = vweird.f32 %v1448
    %vm1457 = vweird.f32 %v1450
    %vm1458 = vmor %vm1456, %vm1457
    %v1459 = vsel %vm1458, %v1450, %v1455
    %v1460 = vrsqrt.pop %v1449
    %v1461 = vmul.f32 %v1460, %v1449
    %v1462 = vmul.f32 %v1461, %v1460
    %v1463 = vmul.f32 0.5, %v1462
    %v1464 = vsub.f32 1.5, %v1463
    %v1465 = vmul.f32 %v1460, %v1464
    %vm1466 = vweird.f32 %v1449
    %vm1467 = vweird.f32 %v1460
    %vm1468 = vmor %vm1466, %vm1467
    %v1469 = vsel %vm1468, %v1460, %v1465
    %v1470 = vmul.f32 %v1436, %v1459
    %v1471 = vmul.f32 %v1437, %v1469
    %v1472 = vperm.slane %v1426, 0
    %v1473 = vmul.f32 %v1470, %v1472
    %v1474 = vmul.f32 %v1471, %v1472
    %v1475 = vperm.slane %v1427, 0
    %v1476 = vadd.f32 %v1473, %v1475
    %v1477 = vadd.f32 %v1474, %v1475
    %v1479 = vrot.slane %v1477, 7
    %vm1481 = vcmask 1040384
    %v1482 = vsel %vm1481, %v1476, %v1479
    %v1483 = vld [vmem:[#allocation8 + $0xa0] sm:$0xf]
    %v1484 = vld [vmem:[#allocation8 + $0xa4] sm:$0xf]
    %v1485 = vld [vmem:[#allocation8 + $0xa8] sm:$0xf]
    %v1486 = vld [vmem:[#allocation8 + $0xac] sm:$0xf]
    %v1487 = vpack.c.bf16 %v1482, %v1482
    %v1488 = vld [vmem:[#allocation7 + $0x12] sm:$0x1]
    %v1489 = vperm.slane %v1488, 0
    %v1494 = vunpack.c.l.b16 %v1483
    %v1495 = vunpack.c.l.b16 %v1484
    %v1496 = vunpack.c.l.b16 %v1485
    %v1497 = vunpack.c.l.b16 %v1486
    %v1498 = vpack.c.b16 %v1495, %v1494
    %v1499 = vpack.c.b16 %v1497, %v1496
    %v1503 = vsel %vm88, %v1487, 0
    %1505 = vmatpush.bf16.msra.mxu0 0
    %1506 = vmatpush.bf16.msra.mxu0 0
    %1507 = vmatpush.bf16.msra.mxu0 0
    %1508 = vmatpush.bf16.msra.mxu0 0
    %1509 = vmatpush.bf16.msra.mxu0 0
    %1510 = vmatpush.bf16.msra.mxu0 0
    %1511 = vmatpush.bf16.msra.mxu0 %v1499
    %1512 = vmatpush.bf16.msra.mxu0 %v1498
    %1513 = vmatmul.bf16.gmra.mxu0 %v1503
    %v1514 = vpop.f32.mrf.mxu0
    %v1515 = vadd.f32 %v1489, %v1514
    %v1516 = vpop.f32.mrf.mxu0
    %1517 = vdwg.mxu0
    %v1518 = vtanh.pop %v1515
    %vm1519 = vcmask 1041408
    %v1520 = vsel %vm1519, %v1518, 0.0
    %v1521 = vld [vmem:[#allocation8 + $0xb0] sm:$0xf]
    %v1522 = vld [vmem:[#allocation8 + $0xb4] sm:$0xf]
    %v1523 = vld [vmem:[#allocation8 + $0xb8] sm:$0xf]
    %v1524 = vld [vmem:[#allocation8 + $0xbc] sm:$0xf]
    %v1525 = vpack.c.bf16 %v1520, %v1520
    %v1526 = vld [vmem:[#allocation7 + $0x13] sm:$0x1]
    %v1527 = vperm.slane %v1526, 0
    %v1532 = vunpack.c.l.b16 %v1521
    %v1533 = vunpack.c.l.b16 %v1522
    %v1534 = vunpack.c.l.b16 %v1523
    %v1535 = vunpack.c.l.b16 %v1524
    %v1536 = vpack.c.b16 %v1533, %v1532
    %v1537 = vpack.c.b16 %v1535, %v1534
    %v1541 = vsel %vm88, %v1525, 0
    %1543 = vmatpush.bf16.msra.mxu0 0
    %1544 = vmatpush.bf16.msra.mxu0 0
    %1545 = vmatpush.bf16.msra.mxu0 0
    %1546 = vmatpush.bf16.msra.mxu0 0
    %1547 = vmatpush.bf16.msra.mxu0 0
    %1548 = vmatpush.bf16.msra.mxu0 0
    %1549 = vmatpush.bf16.msra.mxu0 %v1537
    %1550 = vmatpush.bf16.msra.mxu0 %v1536
    %1551 = vmatmul.bf16.gmra.mxu0 %v1541
    %v1552 = vpop.f32.mrf.mxu0
    %v1553 = vadd.f32 %v1527, %v1552
    %v1554 = vpop.f32.mrf.mxu0
    %1555 = vdwg.mxu0
    %1556 = vst [vmem:[#allocation10] sm:$0xff] %v1553
    // Predicated region
    $region34: #{tpu_custom_call.1} parent=1 // pred_check
      _
    $region35: #{tpu_custom_call.1} parent=1 // pred_check_branch
      %1558 = sbr.rel (0) target = $region37
    $region36: #{tpu_custom_call.1} parent=1 // pred_region
      %1560 = vsyncadd [#allocation4], 0
      %s1562 = sshll.u32 [#allocation10], 4
      %s1563 = int_to_ptr.vmem [resolvable:$true] %s1562
      %s1564 = sshll.u32 %s4, 4
      %s1565 = int_to_ptr.hbm [resolvable:$true] %s1564
      %1567 = dma.vmem_to_hbm [thread:$0]  %s1563, 128, %s1565, [#allocation4]
    $region37: #{tpu_custom_call.1} parent=1 // pred_fallthru
      _
    // Predicated region
    $region38: #{tpu_custom_call.1} parent=1 // pred_check
      _
    $region39: #{tpu_custom_call.1} parent=1 // pred_check_branch
      %1569 = sbr.rel (0) target = $region41
    $region40: #{tpu_custom_call.1} parent=1 // pred_region
      %1571 = dma.done [#allocation4], 128
    $region41: #{tpu_custom_call.1} parent=1 // pred_fallthru
      _
    %1572 = vsyncpa [#allocation3], 1
    %1573 = vsyncpa [#allocation6], 1
    %1574 = vsyncpa [#allocation9], 1
    %1575 = vsyncpa [#allocation4], 1

</llo_original>
